<compile_context>
chip_gen: v5e
topology: v5e:2x2
jax: 0.10.0
libtpu: 0.0.40
codegen_flags: <defaults>
</compile_context>

<pallas_src>
from functools import partial

import jax
import jax.numpy as jnp
from jax.experimental import pallas as pl
from jax.experimental.pallas import tpu as pltpu


# Above the 16/32 MiB scoped defaults, below v7x's 64 MiB physical VMEM.
_VMEM_LIMIT = 48 * 1024 * 1024


# ---------------------------------------------------------------------------
# Kernel 1: fused [prev-BN scale/shift (+ReLU)] -> zero-pad (VMEM) -> im2col ->
#           3x3 conv as a single bf16 MXU matmul (f32 accumulate) ->
#           per-batch partial sum / sum-of-squares for the *next* BatchNorm.
# ---------------------------------------------------------------------------
def _conv3x3_fused_kernel(h_ref, scale_ref, shift_ref, w_ref,
                          y_ref, sum_ref, sumsq_ref, pad_ref, *,
                          relu_input):
    # h_ref:     (1, H, W, Cin)   pre-BN output of previous conv (or block input)
    # scale_ref: (1, Cin)         previous BN scale (ones for the first conv)
    # shift_ref: (1, Cin)         previous BN shift (zeros for the first conv)
    # w_ref:     (9*Cin, Cout)    HWIO weight reshaped to im2col layout, bf16
    # y_ref:     (1, H, W, Cout)  pre-BN conv output of this block
    # sum_ref:   (1, 1, Cout)     per-batch-element partial sums (wrapper reduces)
    # sumsq_ref: (1, 1, Cout)
    # pad_ref:   (H+2, W+2, Cin)  VMEM scratch holding the zero-padded activation
    H, W, Cout = y_ref.shape[1], y_ref.shape[2], y_ref.shape[3]
    Cin = h_ref.shape[3]

    # ---- fused BatchNorm (+ReLU) of the previous block, applied on-chip ----
    a = (h_ref[0] * scale_ref[...].reshape(1, 1, Cin)
         + shift_ref[...].reshape(1, 1, Cin))
    if relu_input:
        a = jnp.maximum(a, 0.0)

    # ---- stage zero-padded activation in VMEM (halo = post-activation zeros)
    pad_ref[...] = jnp.zeros_like(pad_ref)
    pad_ref[1:H + 1, 1:W + 1, :] = a

    # ---- im2col: one (H*W, 9*Cin) @ (9*Cin, Cout) matmul, bf16 in / f32 acc
    patches = jnp.concatenate(
        [pad_ref[dy:dy + H, dx:dx + W, :]
         for dy in range(3) for dx in range(3)], axis=-1)
    patches = patches.reshape(H * W, 9 * Cin).astype(jnp.bfloat16)
    acc = jnp.dot(patches, w_ref[...], preferred_element_type=jnp.float32)

    y_ref[0] = acc.reshape(H, W, Cout).astype(y_ref.dtype)
    # stats stay in f32 on the VPU
    sum_ref[0] = jnp.sum(acc, axis=0, keepdims=True)
    sumsq_ref[0] = jnp.sum(acc * acc, axis=0, keepdims=True)


def conv3x3_fused(h, scale, shift, w9, *, relu_input):
    N, H, W, Cin = h.shape
    Cout = w9.shape[-1]
    kernel = partial(_conv3x3_fused_kernel, relu_input=relu_input)
    return pl.pallas_call(
        kernel,
        out_shape=(
            jax.ShapeDtypeStruct((N, H, W, Cout), jnp.float32),
            jax.ShapeDtypeStruct((N, 1, Cout), jnp.float32),
            jax.ShapeDtypeStruct((N, 1, Cout), jnp.float32),
        ),
        grid_spec=pltpu.PrefetchScalarGridSpec(
            num_scalar_prefetch=0,
            grid=(N,),
            in_specs=[
                pl.BlockSpec((1, H, W, Cin), lambda n: (n, 0, 0, 0)),
                pl.BlockSpec((1, Cin), lambda n: (0, 0)),
                pl.BlockSpec((1, Cin), lambda n: (0, 0)),
                pl.BlockSpec((9 * Cin, Cout), lambda n: (0, 0)),
            ],
            out_specs=[
                pl.BlockSpec((1, H, W, Cout), lambda n: (n, 0, 0, 0)),
                pl.BlockSpec((1, 1, Cout), lambda n: (n, 0, 0)),
                pl.BlockSpec((1, 1, Cout), lambda n: (n, 0, 0)),
            ],
            scratch_shapes=[pltpu.VMEM((H + 2, W + 2, Cin), jnp.float32)],
        ),
        compiler_params=pltpu.CompilerParams(
            dimension_semantics=("parallel",),      # per-batch partial stats
            vmem_limit_bytes=_VMEM_LIMIT),
    )(h, scale, shift, w9)


# ---------------------------------------------------------------------------
# Kernel 2: fused BatchNorm (scale/shift) + ReLU — only for the LAST block.
# ---------------------------------------------------------------------------
def _bn_relu_kernel(y_ref, scale_ref, shift_ref, o_ref):
    C = y_ref.shape[3]
    y = y_ref[...]                                   # (1, H, W, C)
    scale = scale_ref[...].reshape(1, 1, 1, C)
    shift = shift_ref[...].reshape(1, 1, 1, C)
    o_ref[...] = jnp.maximum(y * scale + shift, 0.0).astype(o_ref.dtype)


def bn_relu(y, scale, shift):
    N, H, W, C = y.shape
    return pl.pallas_call(
        _bn_relu_kernel,
        out_shape=jax.ShapeDtypeStruct((N, H, W, C), jnp.float32),
        grid_spec=pltpu.PrefetchScalarGridSpec(
            num_scalar_prefetch=0,
            grid=(N,),
            in_specs=[
                pl.BlockSpec((1, H, W, C), lambda n: (n, 0, 0, 0)),
                pl.BlockSpec((1, C), lambda n: (0, 0)),
                pl.BlockSpec((1, C), lambda n: (0, 0)),
            ],
            out_specs=pl.BlockSpec((1, H, W, C), lambda n: (n, 0, 0, 0)),
        ),
        compiler_params=pltpu.CompilerParams(
            dimension_semantics=("parallel",),
            vmem_limit_bytes=_VMEM_LIMIT),
    )(y, scale, shift)


# ---------------------------------------------------------------------------
# Full DecoderBlock2D forward (NCHW in / NCHW out, like the PyTorch module)
# ---------------------------------------------------------------------------
def decoder_block_2d(x_nchw, skip_nchw, conv_weights, eps=1e-5):
    # 2x nearest upsample + channel concat + NCHW<->NHWC kept as plain XLA ops
    # (transpose runs on the small pre-upsample x; the zero-pad / BN / ReLU
    #  HBM passes of the previous version are now fused into the conv kernel).
    # TODO(synk): fuse upsample/concat into the first conv's input staging and
    # add H-tiling with a 1-row halo for large decoder spatial sizes.
    x = jnp.transpose(x_nchw, (0, 2, 3, 1)).astype(jnp.float32)  # (N,Hin,Win,Cx)
    x = jnp.repeat(jnp.repeat(x, 2, axis=1), 2, axis=2)          # nearest 2x
    if skip_nchw is not None:
        sk = jnp.transpose(skip_nchw, (0, 2, 3, 1)).astype(jnp.float32)
        x = jnp.concatenate([x, sk], axis=-1)

    h = x
    N, H, W, _ = h.shape
    count = float(N * H * W)

    # identity "previous BN" for the very first conv (no ReLU on its input)
    scale = jnp.ones((1, h.shape[-1]), jnp.float32)
    shift = jnp.zeros((1, h.shape[-1]), jnp.float32)
    relu_input = False

    for w in conv_weights:
        cin, cout = w.shape[2], w.shape[3]
        w9 = w.reshape(9 * cin, cout).astype(jnp.bfloat16)   # im2col weight layout
        y, s, ss = conv3x3_fused(h, scale, shift, w9, relu_input=relu_input)

        # tiny cross-batch reduction of per-element partial stats (in XLA)
        total = jnp.sum(s, axis=0)                            # (1, Cout)
        total_sq = jnp.sum(ss, axis=0)                        # (1, Cout)
        mean = total / count
        var = jnp.maximum(total_sq / count - mean * mean, 0.0)  # biased var
        inv_std = jax.lax.rsqrt(var + eps)
        scale = inv_std                                       # gamma = 1
        shift = -mean * inv_std                               # beta  = 0

        h = y
        relu_input = True

    out = bn_relu(h, scale, shift)                            # final BN + ReLU
    return jnp.transpose(out, (0, 3, 1, 2))                   # NHWC -> NCHW


def make_weights(key, num_blocks, in_channels, skip_channels, out_channels,
                 kernel_size=3):
    """Deterministic kaiming_uniform(mode='fan_out', nonlinearity='relu'), HWIO."""
    weights = []
    cin = in_channels + skip_channels
    for _ in range(num_blocks):
        key, sub = jax.random.split(key)
        fan_out = out_channels * kernel_size * kernel_size
        gain = jnp.sqrt(2.0)                                  # relu gain
        bound = gain * jnp.sqrt(3.0 / fan_out)
        w = jax.random.uniform(sub, (kernel_size, kernel_size, cin, out_channels),
                               minval=-bound, maxval=bound, dtype=jnp.float32)
        weights.append(w)
        cin = out_channels
    return weights


if __name__ == "__main__":
    key = jax.random.PRNGKey(0)
    k_x, k_skip, k_w = jax.random.split(key, 3)

    # Small shapes consistent with the module (channels kept lane-friendly):
    num_blocks = 2
    in_channels, skip_channels, out_channels = 16, 16, 32
    N, Hin, Win = 2, 8, 8                                     # x upsamples to 16x16

    x = jax.random.normal(k_x, (N, in_channels, Hin, Win), dtype=jnp.float32)
    skip = jax.random.normal(k_skip, (N, skip_channels, 2 * Hin, 2 * Win),
                             dtype=jnp.float32)
    conv_weights = make_weights(k_w, num_blocks, in_channels, skip_channels,
                                out_channels)

    out = decoder_block_2d(x, skip, conv_weights)
    out = jax.block_until_ready(out)
    assert out.shape == (N, out_channels, 2 * Hin, 2 * Win)
    print("KERNEL_OK")
</pallas_src>

<mosaic_0001>
module attributes {stable_mosaic.version = 11 : i64} {
  func.func @_conv3x3_fused_kernel(%arg0: i32, %arg1: memref<1x16x16x32xf32, #tpu.memory_space<vmem>>, %arg2: memref<1x32xf32, #tpu.memory_space<vmem>>, %arg3: memref<1x32xf32, #tpu.memory_space<vmem>>, %arg4: memref<288x32xbf16, #tpu.memory_space<vmem>>, %arg5: memref<1x16x16x32xf32, #tpu.memory_space<vmem>>, %arg6: memref<1x1x32xf32, #tpu.memory_space<vmem>>, %arg7: memref<1x1x32xf32, #tpu.memory_space<vmem>>, %arg8: memref<18x18x32xf32, #tpu.memory_space<vmem>>) attributes {dimension_semantics = [#tpu.dimension_semantics<parallel>], iteration_bounds = array<i64: 2>, scalar_prefetch = 0 : i64, scratch_operands = 1 : i64, tpu.core_type = #tpu.core_type<tc>, window_params = [{transform_indices = @transform_0, window_bounds = array<i64: 1, 16, 16, 32>}, {pipeline_mode = #tpu.pipeline_mode<synchronous>, transform_indices = @transform_1, window_bounds = array<i64: 1, 32>}, {pipeline_mode = #tpu.pipeline_mode<synchronous>, transform_indices = @transform_2, window_bounds = array<i64: 1, 32>}, {pipeline_mode = #tpu.pipeline_mode<synchronous>, transform_indices = @transform_3, window_bounds = array<i64: 288, 32>}, {transform_indices = @transform_4, window_bounds = array<i64: 1, 16, 16, 32>}, {transform_indices = @transform_5, window_bounds = array<i64: 1, 1, 32>}, {transform_indices = @transform_6, window_bounds = array<i64: 1, 1, 32>}]} {
    %c0 = arith.constant 0 : index
    %c0_0 = arith.constant 0 : index
    %c0_1 = arith.constant 0 : index
    %c0_2 = arith.constant 0 : index
    %0 = vector.load %arg1[%c0, %c0_0, %c0_1, %c0_2] : memref<1x16x16x32xf32, #tpu.memory_space<vmem>>, vector<1x16x16x32xf32>
    %1 = vector.shape_cast %0 : vector<1x16x16x32xf32> to vector<16x16x32xf32>
    %c0_3 = arith.constant 0 : index
    %c0_4 = arith.constant 0 : index
    %2 = vector.load %arg2[%c0_3, %c0_4] : memref<1x32xf32, #tpu.memory_space<vmem>>, vector<1x32xf32>
    %3 = vector.shape_cast %2 : vector<1x32xf32> to vector<1x1x32xf32>
    %4 = vector.broadcast %3 : vector<1x1x32xf32> to vector<16x16x32xf32>
    %5 = arith.mulf %1, %4 : vector<16x16x32xf32>
    %c0_5 = arith.constant 0 : index
    %c0_6 = arith.constant 0 : index
    %6 = vector.load %arg3[%c0_5, %c0_6] : memref<1x32xf32, #tpu.memory_space<vmem>>, vector<1x32xf32>
    %7 = vector.shape_cast %6 : vector<1x32xf32> to vector<1x1x32xf32>
    %8 = vector.broadcast %7 : vector<1x1x32xf32> to vector<16x16x32xf32>
    %9 = arith.addf %5, %8 : vector<16x16x32xf32>
    %cst = arith.constant 0.000000e+00 : f32
    %10 = vector.broadcast %cst : f32 to vector<18x18x32xf32>
    %c0_7 = arith.constant 0 : index
    %c0_8 = arith.constant 0 : index
    %c0_9 = arith.constant 0 : index
    %11 = vector.load %arg8[%c0_7, %c0_8, %c0_9] : memref<18x18x32xf32, #tpu.memory_space<vmem>>, vector<18x18x32xf32>
    tpu.vector_store %arg8[%c0_7, %c0_8, %c0_9], %10 {strides = array<i32>} : memref<18x18x32xf32, #tpu.memory_space<vmem>>, vector<18x18x32xf32>,
    %c1 = arith.constant 1 : index
    %c1_10 = arith.constant 1 : index
    %c0_11 = arith.constant 0 : index
    %12 = vector.load %arg8[%c1, %c1_10, %c0_11] : memref<18x18x32xf32, #tpu.memory_space<vmem>>, vector<16x16x32xf32>
    tpu.vector_store %arg8[%c1, %c1_10, %c0_11], %9 {strides = array<i32>} : memref<18x18x32xf32, #tpu.memory_space<vmem>>, vector<16x16x32xf32>,
    %c0_12 = arith.constant 0 : index
    %c0_13 = arith.constant 0 : index
    %c0_14 = arith.constant 0 : index
    %13 = vector.load %arg8[%c0_12, %c0_13, %c0_14] : memref<18x18x32xf32, #tpu.memory_space<vmem>>, vector<16x16x32xf32>
    %c0_15 = arith.constant 0 : index
    %c1_16 = arith.constant 1 : index
    %c0_17 = arith.constant 0 : index
    %14 = vector.load %arg8[%c0_15, %c1_16, %c0_17] : memref<18x18x32xf32, #tpu.memory_space<vmem>>, vector<16x16x32xf32>
    %c0_18 = arith.constant 0 : index
    %c2 = arith.constant 2 : index
    %c0_19 = arith.constant 0 : index
    %15 = vector.load %arg8[%c0_18, %c2, %c0_19] : memref<18x18x32xf32, #tpu.memory_space<vmem>>, vector<16x16x32xf32>
    %c1_20 = arith.constant 1 : index
    %c0_21 = arith.constant 0 : index
    %c0_22 = arith.constant 0 : index
    %16 = vector.load %arg8[%c1_20, %c0_21, %c0_22] : memref<18x18x32xf32, #tpu.memory_space<vmem>>, vector<16x16x32xf32>
    %c1_23 = arith.constant 1 : index
    %c1_24 = arith.constant 1 : index
    %c0_25 = arith.constant 0 : index
    %17 = vector.load %arg8[%c1_23, %c1_24, %c0_25] : memref<18x18x32xf32, #tpu.memory_space<vmem>>, vector<16x16x32xf32>
    %c1_26 = arith.constant 1 : index
    %c2_27 = arith.constant 2 : index
    %c0_28 = arith.constant 0 : index
    %18 = vector.load %arg8[%c1_26, %c2_27, %c0_28] : memref<18x18x32xf32, #tpu.memory_space<vmem>>, vector<16x16x32xf32>
    %c2_29 = arith.constant 2 : index
    %c0_30 = arith.constant 0 : index
    %c0_31 = arith.constant 0 : index
    %19 = vector.load %arg8[%c2_29, %c0_30, %c0_31] : memref<18x18x32xf32, #tpu.memory_space<vmem>>, vector<16x16x32xf32>
    %c2_32 = arith.constant 2 : index
    %c1_33 = arith.constant 1 : index
    %c0_34 = arith.constant 0 : index
    %20 = vector.load %arg8[%c2_32, %c1_33, %c0_34] : memref<18x18x32xf32, #tpu.memory_space<vmem>>, vector<16x16x32xf32>
    %c2_35 = arith.constant 2 : index
    %c2_36 = arith.constant 2 : index
    %c0_37 = arith.constant 0 : index
    %21 = vector.load %arg8[%c2_35, %c2_36, %c0_37] : memref<18x18x32xf32, #tpu.memory_space<vmem>>, vector<16x16x32xf32>
    %22 = tpu.concatenate %13, %14, %15, %16, %17, %18, %19, %20, %21 in 2 : vector<16x16x32xf32>, vector<16x16x32xf32>, vector<16x16x32xf32>, vector<16x16x32xf32>, vector<16x16x32xf32>, vector<16x16x32xf32>, vector<16x16x32xf32>, vector<16x16x32xf32>, vector<16x16x32xf32> -> vector<16x16x288xf32>
    %23 = vector.shape_cast %22 : vector<16x16x288xf32> to vector<256x288xf32>
    %24 = arith.truncf %23 : vector<256x288xf32> to vector<256x288xbf16>
    %c0_38 = arith.constant 0 : index
    %c0_39 = arith.constant 0 : index
    %25 = vector.load %arg4[%c0_38, %c0_39] : memref<288x32xbf16, #tpu.memory_space<vmem>>, vector<288x32xbf16>
    %cst_40 = arith.constant dense<0.000000e+00> : vector<256x32xf32>
    %26 = tpu.matmul %24, %25, %cst_40 {dimension_numbers = #tpu.dot_dimension_numbers<[1], [0], [0], [1], [0, 0, 1, 1], [], []>} : vector<256x288xbf16>, vector<288x32xbf16>, vector<256x32xf32> -> vector<256x32xf32>
    %27 = vector.shape_cast %26 : vector<256x32xf32> to vector<16x16x32xf32>
    %c0_41 = arith.constant 0 : index
    %c0_42 = arith.constant 0 : index
    %c0_43 = arith.constant 0 : index
    %c0_44 = arith.constant 0 : index
    %28 = vector.load %arg5[%c0_41, %c0_42, %c0_43, %c0_44] : memref<1x16x16x32xf32, #tpu.memory_space<vmem>>, vector<1x16x16x32xf32>
    %29 = vector.shape_cast %28 : vector<1x16x16x32xf32> to vector<16x16x32xf32>
    %30 = vector.shape_cast %27 : vector<16x16x32xf32> to vector<1x16x16x32xf32>
    tpu.vector_store %arg5[%c0_41, %c0_42, %c0_43, %c0_44], %30 {strides = array<i32>} : memref<1x16x16x32xf32, #tpu.memory_space<vmem>>, vector<1x16x16x32xf32>,
    %cst_45 = arith.constant dense<0.000000e+00> : vector<32xf32>
    %31 = vector.multi_reduction <add>, %26, %cst_45 [0] : vector<256x32xf32> to vector<32xf32>
    %32 = vector.shape_cast %31 : vector<32xf32> to vector<1x32xf32>
    %c0_46 = arith.constant 0 : index
    %c0_47 = arith.constant 0 : index
    %c0_48 = arith.constant 0 : index
    %33 = vector.load %arg6[%c0_46, %c0_47, %c0_48] : memref<1x1x32xf32, #tpu.memory_space<vmem>>, vector<1x1x32xf32>
    %34 = vector.shape_cast %33 : vector<1x1x32xf32> to vector<1x32xf32>
    %35 = vector.shape_cast %32 : vector<1x32xf32> to vector<1x1x32xf32>
    tpu.vector_store %arg6[%c0_46, %c0_47, %c0_48], %35 {strides = array<i32>} : memref<1x1x32xf32, #tpu.memory_space<vmem>>, vector<1x1x32xf32>,
    %36 = arith.mulf %26, %26 : vector<256x32xf32>
    %cst_49 = arith.constant dense<0.000000e+00> : vector<32xf32>
    %37 = vector.multi_reduction <add>, %36, %cst_49 [0] : vector<256x32xf32> to vector<32xf32>
    %38 = vector.shape_cast %37 : vector<32xf32> to vector<1x32xf32>
    %c0_50 = arith.constant 0 : index
    %c0_51 = arith.constant 0 : index
    %c0_52 = arith.constant 0 : index
    %39 = vector.load %arg7[%c0_50, %c0_51, %c0_52] : memref<1x1x32xf32, #tpu.memory_space<vmem>>, vector<1x1x32xf32>
    %40 = vector.shape_cast %39 : vector<1x1x32xf32> to vector<1x32xf32>
    %41 = vector.shape_cast %38 : vector<1x32xf32> to vector<1x1x32xf32>
    tpu.vector_store %arg7[%c0_50, %c0_51, %c0_52], %41 {strides = array<i32>} : memref<1x1x32xf32, #tpu.memory_space<vmem>>, vector<1x1x32xf32>,
    return
  }
  func.func @transform_0(%arg0: i32) -> (i32, i32, i32, i32) {
    %c0_i32 = arith.constant 0 : i32
    %c0_i32_0 = arith.constant 0 : i32
    %c0_i32_1 = arith.constant 0 : i32
    %c0_i32_2 = arith.constant 0 : i32
    return %arg0, %c0_i32, %c0_i32_0, %c0_i32_1 : i32, i32, i32, i32
  }
  func.func @transform_1(%arg0: i32) -> (i32, i32) {
    %c0_i32 = arith.constant 0 : i32
    %c0_i32_0 = arith.constant 0 : i32
    %c0_i32_1 = arith.constant 0 : i32
    return %c0_i32, %c0_i32_0 : i32, i32
  }
  func.func @transform_2(%arg0: i32) -> (i32, i32) {
    %c0_i32 = arith.constant 0 : i32
    %c0_i32_0 = arith.constant 0 : i32
    %c0_i32_1 = arith.constant 0 : i32
    return %c0_i32, %c0_i32_0 : i32, i32
  }
  func.func @transform_3(%arg0: i32) -> (i32, i32) {
    %c0_i32 = arith.constant 0 : i32
    %c0_i32_0 = arith.constant 0 : i32
    %c0_i32_1 = arith.constant 0 : i32
    return %c0_i32, %c0_i32_0 : i32, i32
  }
  func.func @transform_4(%arg0: i32) -> (i32, i32, i32, i32) {
    %c0_i32 = arith.constant 0 : i32
    %c0_i32_0 = arith.constant 0 : i32
    %c0_i32_1 = arith.constant 0 : i32
    %c0_i32_2 = arith.constant 0 : i32
    return %arg0, %c0_i32, %c0_i32_0, %c0_i32_1 : i32, i32, i32, i32
  }
  func.func @transform_5(%arg0: i32) -> (i32, i32, i32) {
    %c0_i32 = arith.constant 0 : i32
    %c0_i32_0 = arith.constant 0 : i32
    %c0_i32_1 = arith.constant 0 : i32
    return %arg0, %c0_i32, %c0_i32_0 : i32, i32, i32
  }
  func.func @transform_6(%arg0: i32) -> (i32, i32, i32) {
    %c0_i32 = arith.constant 0 : i32
    %c0_i32_0 = arith.constant 0 : i32
    %c0_i32_1 = arith.constant 0 : i32
    return %arg0, %c0_i32, %c0_i32_0 : i32, i32, i32
  }
}

</mosaic_0001>

<llo_original>
// kernel: tpu_custom_call.1
$region0: #{tpu_custom_call.1}
  #allocation0 [shape = 'u32[]', space=smem, size = 0x4, offset = 0x4, fixed_abs, tag = 'smem constant byte address 0x4 - core index']
  #allocation1 [shape = 'u32[72,128]{1,0:T(1,128)}', space=vmem, size = 0x9000, scoped, tag = 'internal scratch']
  #allocation2 [shape = 'f32[18,18,32]{2,1,0:T(8,128)}', space=vmem, size = 0x36000, scoped, tag = 'scratch operand']
  %s0 = inlined_call_operand.hbm [shape: f32[2,16,16,32], index: 0, kind: input, shape index: {}]
  %s1 = inlined_call_operand.vmem [shape: f32[1,32], index: 1, kind: input, shape index: {}]
  %s2 = inlined_call_operand.vmem [shape: f32[1,32], index: 2, kind: input, shape index: {}]
  %s3 = inlined_call_operand.vmem [shape: bf16[288,32], index: 3, kind: input, shape index: {}]
  %s4 = inlined_call_operand.hbm [shape: f32[2,16,16,32], index: 4, kind: output, shape index: {0}]
  %s5 = inlined_call_operand.hbm [shape: f32[2,1,32], index: 5, kind: output, shape index: {1}]
  %s6 = inlined_call_operand.hbm [shape: f32[2,1,32], index: 6, kind: output, shape index: {2}]
  %7 = xla_tuple %s4, %s5, %s6
  %s8 = sld [smem:[#allocation0]]
  $region69: #{tpu_custom_call.1} parent=0
    _
  %s10 = ssub.s32 1, %s8
  %s11 = scalar_select 0, %s10, %s8
  $region1: #{tpu_custom_call.1} parent=0
    #allocation3 [shape = 'u8[262144]{0}', space=vmem, size = 0x40000, scoped, tag = 'input window, operand 0']
    #allocation4 [shape = 's32[2]{0}', space=sflag, size = 0x8, scoped, tag = 'scoped memory for tpu_custom_call.1']
    #allocation5 [shape = 's32[2]{0}', space=sflag, size = 0x8, scoped, tag = 'scoped memory for tpu_custom_call.1']
    #allocation6 [shape = 'u8[262144]{0}', space=vmem, size = 0x40000, scoped, tag = 'output window, operand 0']
    #allocation7 [shape = 'u8[1024]{0}', space=vmem, size = 0x400, scoped, tag = 'output window, operand 1']
    #allocation8 [shape = 's32[2]{0}', space=sflag, size = 0x8, scoped, tag = 'scoped memory for tpu_custom_call.1']
    #allocation9 [shape = 'u8[1024]{0}', space=vmem, size = 0x400, scoped, tag = 'output window, operand 2']
    %12 = vsyncpa [#allocation4], 0
    %s13 = scalar_lea.sflag [#allocation4], 1
    %14 = vsyncpa %s13, 0
    %15 = vsyncpa [#allocation5], 0
    %s16 = scalar_lea.sflag [#allocation5], 1
    %17 = vsyncpa %s16, 0
    %18 = vsyncpa [#allocation8], 0
    %s19 = scalar_lea.sflag [#allocation8], 1
    %20 = vsyncpa %s19, 0
    loop: start=0, step=1, limit=4
    $region2: #{tpu_custom_call.1} parent=1 // loop_pre_header
      _
    $region3: #{tpu_custom_call.1} parent=1 // loop_header
      %s22 = sphi 0, %s26
      %p23 = scmp.ge.s32.totalorder %s22, 4
      %s32 = sphi 0, %s34
      %s35 = sphi 0, %s32
      %s36 = sphi 0, %s35
      %s52 = sphi 0, %s36
      %s56 = sphi 0, %s56
      %s58 = sphi 0, %s56
      %s59 = sphi 0, %s58
      %s73 = sphi 0, %s59
      %s77 = sphi 0, %s77
      %s79 = sphi 0, %s77
      %s80 = sphi 0, %s79
      %s94 = sphi 0, %s80
      %s98 = sphi 0, %s98
      %s100 = sphi 0, %s98
      %s101 = sphi 0, %s100
      %s115 = sphi 0, %s101
      %s121 = sphi 0, %s123
      %s124 = sphi 0, %s121
      %s125 = sphi 0, %s124
      %s141 = sphi 0, %s125
      %s147 = sphi 0, %s149
      %s150 = sphi 0, %s147
      %s151 = sphi 0, %s150
      %s167 = sphi 0, %s151
      %s173 = sphi 0, %s175
      %s176 = sphi 0, %s173
      %s177 = sphi 0, %s176
      %s193 = sphi 0, %s177
    $region4: #{tpu_custom_call.1} parent=1 // loop_header_branch
      %25 = sbr.rel (%p23) target = $region8
    $region5: #{tpu_custom_call.1} parent=1 // loop_body
      %s27 = ssub.s32 %s22, 1
      %s28 = ssub.s32 %s22, 2
      %s29 = sadd.s32 %s22, 1
      %s30 = ssub.s32 %s22, %s29
      %p31 = scmp.eq.s32.totalorder %s30, 0
      %s33 = sadd.s32 %s32, 1
      %s34 = scalar_select %p31, %s32, %s33
      %p37 = pneg %p31
      %p38 = scmp.eq.s32.totalorder %s22, 1
      %p39 = por %p37, %p38
      %p40 = scmp.ne.s32.totalorder %s32, %s35
      %p41 = scmp.eq.s32.totalorder %s22, 0
      %p42 = por %p40, %p41
      %p43 = scmp.ne.s32.totalorder %s32, %s35
      %p44 = scmp.eq.s32.totalorder %s27, 1
      %p45 = por %p43, %p44
      %p46 = scmp.ne.s32.totalorder %s35, %s36
      %p47 = scmp.eq.s32.totalorder %s27, 0
      %p48 = por %p46, %p47
      %p49 = scmp.ne.s32.totalorder %s35, %s36
      %p50 = scmp.eq.s32.totalorder %s28, 1
      %p51 = por %p49, %p50
      %p53 = scmp.ne.s32.totalorder %s36, %s52
      %p54 = scmp.eq.s32.totalorder %s28, 0
      %p55 = por %p53, %p54
      %s57 = sadd.s32 %s56, 1
      %p60 = scmp.eq.s32.totalorder %s22, 1
      %p61 = scmp.ne.s32.totalorder %s56, %s58
      %p62 = scmp.eq.s32.totalorder %s22, 0
      %p63 = por %p61, %p62
      %p64 = scmp.ne.s32.totalorder %s56, %s58
      %p65 = scmp.eq.s32.totalorder %s27, 1
      %p66 = por %p64, %p65
      %p67 = scmp.ne.s32.totalorder %s58, %s59
      %p68 = scmp.eq.s32.totalorder %s27, 0
      %p69 = por %p67, %p68
      %p70 = scmp.ne.s32.totalorder %s58, %s59
      %p71 = scmp.eq.s32.totalorder %s28, 1
      %p72 = por %p70, %p71
      %p74 = scmp.ne.s32.totalorder %s59, %s73
      %p75 = scmp.eq.s32.totalorder %s28, 0
      %p76 = por %p74, %p75
      %s78 = sadd.s32 %s77, 1
      %p81 = scmp.eq.s32.totalorder %s22, 1
      %p82 = scmp.ne.s32.totalorder %s77, %s79
      %p83 = scmp.eq.s32.totalorder %s22, 0
      %p84 = por %p82, %p83
      %p85 = scmp.ne.s32.totalorder %s77, %s79
      %p86 = scmp.eq.s32.totalorder %s27, 1
      %p87 = por %p85, %p86
      %p88 = scmp.ne.s32.totalorder %s79, %s80
      %p89 = scmp.eq.s32.totalorder %s27, 0
      %p90 = por %p88, %p89
      %p91 = scmp.ne.s32.totalorder %s79, %s80
      %p92 = scmp.eq.s32.totalorder %s28, 1
      %p93 = por %p91, %p92
      %p95 = scmp.ne.s32.totalorder %s80, %s94
      %p96 = scmp.eq.s32.totalorder %s28, 0
      %p97 = por %p95, %p96
      %s99 = sadd.s32 %s98, 1
      %p102 = scmp.eq.s32.totalorder %s22, 1
      %p103 = scmp.ne.s32.totalorder %s98, %s100
      %p104 = scmp.eq.s32.totalorder %s22, 0
      %p105 = por %p103, %p104
      %p106 = scmp.ne.s32.totalorder %s98, %s100
      %p107 = scmp.eq.s32.totalorder %s27, 1
      %p108 = por %p106, %p107
      %p109 = scmp.ne.s32.totalorder %s100, %s101
      %p110 = scmp.eq.s32.totalorder %s27, 0
      %p111 = por %p109, %p110
      %p112 = scmp.ne.s32.totalorder %s100, %s101
      %p113 = scmp.eq.s32.totalorder %s28, 1
      %p114 = por %p112, %p113
      %p116 = scmp.ne.s32.totalorder %s101, %s115
      %p117 = scmp.eq.s32.totalorder %s28, 0
      %p118 = por %p116, %p117
      %s119 = ssub.s32 %s22, %s29
      %p120 = scmp.eq.s32.totalorder %s119, 0
      %s122 = sadd.s32 %s121, 1
      %s123 = scalar_select %p120, %s121, %s122
      %p126 = pneg %p120
      %p127 = scmp.eq.s32.totalorder %s22, 1
      %p128 = por %p126, %p127
      %p129 = scmp.ne.s32.totalorder %s121, %s124
      %p130 = scmp.eq.s32.totalorder %s22, 0
      %p131 = por %p129, %p130
      %p132 = scmp.ne.s32.totalorder %s121, %s124
      %p133 = scmp.eq.s32.totalorder %s27, 1
      %p134 = por %p132, %p133
      %p135 = scmp.ne.s32.totalorder %s124, %s125
      %p136 = scmp.eq.s32.totalorder %s27, 0
      %p137 = por %p135, %p136
      %p138 = scmp.ne.s32.totalorder %s124, %s125
      %p139 = scmp.eq.s32.totalorder %s28, 1
      %p140 = por %p138, %p139
      %p142 = scmp.ne.s32.totalorder %s125, %s141
      %p143 = scmp.eq.s32.totalorder %s28, 0
      %p144 = por %p142, %p143
      %s145 = ssub.s32 %s22, %s29
      %p146 = scmp.eq.s32.totalorder %s145, 0
      %s148 = sadd.s32 %s147, 1
      %s149 = scalar_select %p146, %s147, %s148
      %p152 = pneg %p146
      %p153 = scmp.eq.s32.totalorder %s22, 1
      %p154 = por %p152, %p153
      %p155 = scmp.ne.s32.totalorder %s147, %s150
      %p156 = scmp.eq.s32.totalorder %s22, 0
      %p157 = por %p155, %p156
      %p158 = scmp.ne.s32.totalorder %s147, %s150
      %p159 = scmp.eq.s32.totalorder %s27, 1
      %p160 = por %p158, %p159
      %p161 = scmp.ne.s32.totalorder %s150, %s151
      %p162 = scmp.eq.s32.totalorder %s27, 0
      %p163 = por %p161, %p162
      %p164 = scmp.ne.s32.totalorder %s150, %s151
      %p165 = scmp.eq.s32.totalorder %s28, 1
      %p166 = por %p164, %p165
      %p168 = scmp.ne.s32.totalorder %s151, %s167
      %p169 = scmp.eq.s32.totalorder %s28, 0
      %p170 = por %p168, %p169
      %s171 = ssub.s32 %s22, %s29
      %p172 = scmp.eq.s32.totalorder %s171, 0
      %s174 = sadd.s32 %s173, 1
      %s175 = scalar_select %p172, %s173, %s174
      %p178 = pneg %p172
      %p179 = scmp.eq.s32.totalorder %s22, 1
      %p180 = por %p178, %p179
      %p181 = scmp.ne.s32.totalorder %s173, %s176
      %p182 = scmp.eq.s32.totalorder %s22, 0
      %p183 = por %p181, %p182
      %p184 = scmp.ne.s32.totalorder %s173, %s176
      %p185 = scmp.eq.s32.totalorder %s27, 1
      %p186 = por %p184, %p185
      %p187 = scmp.ne.s32.totalorder %s176, %s177
      %p188 = scmp.eq.s32.totalorder %s27, 0
      %p189 = por %p187, %p188
      %p190 = scmp.ne.s32.totalorder %s176, %s177
      %p191 = scmp.eq.s32.totalorder %s28, 1
      %p192 = por %p190, %p191
      %p194 = scmp.ne.s32.totalorder %s177, %s193
      %p195 = scmp.eq.s32.totalorder %s28, 0
      %p196 = por %p194, %p195
      %p197 = scmp.le.s32.totalorder 1, %s22
      %p198 = scmp.lt.s32.totalorder %s22, 3
      %p199 = pnand %p197, %p198
      %p200 = pneg %p199
      // Predicated region
      $region9: #{tpu_custom_call.1} parent=5 // pred_check
        _
      $region10: #{tpu_custom_call.1} parent=5 // pred_check_branch
        %202 = sbr.rel (%p199) target = $region12
      $region11: #{tpu_custom_call.1} parent=5 // pred_region
        %s203 = ssub.s32 %s22, 1
        // Predicated region
        $region13: #{tpu_custom_call.1} parent=11 // pred_check
          %p204 = pneg %p69
        $region14: #{tpu_custom_call.1} parent=11 // pred_check_branch
          %206 = sbr.rel (%p204) target = $region16
        $region15: #{tpu_custom_call.1} parent=11 // pred_region
          _
        $region16: #{tpu_custom_call.1} parent=11 // pred_fallthru
          _
        // Predicated region
        $region17: #{tpu_custom_call.1} parent=11 // pred_check
          %p207 = pneg %p90
        $region18: #{tpu_custom_call.1} parent=11 // pred_check_branch
          %209 = sbr.rel (%p207) target = $region20
        $region19: #{tpu_custom_call.1} parent=11 // pred_region
          _
        $region20: #{tpu_custom_call.1} parent=11 // pred_fallthru
          _
        // Predicated region
        $region21: #{tpu_custom_call.1} parent=11 // pred_check
          %p210 = pneg %p111
        $region22: #{tpu_custom_call.1} parent=11 // pred_check_branch
          %212 = sbr.rel (%p210) target = $region24
        $region23: #{tpu_custom_call.1} parent=11 // pred_region
          _
        $region24: #{tpu_custom_call.1} parent=11 // pred_fallthru
          _
      $region12: #{tpu_custom_call.1} parent=5 // pred_fallthru
        _
      %p213 = scmp.lt.s32.totalorder %s22, 2
      // Predicated region
      $region25: #{tpu_custom_call.1} parent=5 // pred_check
        %p214 = pneg %p213
      $region26: #{tpu_custom_call.1} parent=5 // pred_check_branch
        %216 = sbr.rel (%p214) target = $region28
      $region27: #{tpu_custom_call.1} parent=5 // pred_region
        // Predicated region
        $region29: #{tpu_custom_call.1} parent=27 // pred_check
          %p217 = pneg %p42
        $region30: #{tpu_custom_call.1} parent=27 // pred_check_branch
          %219 = sbr.rel (%p217) target = $region32
        $region31: #{tpu_custom_call.1} parent=27 // pred_region
          %s220 = sand.u32 %s32, 1
          %s221 = scalar_lea.sflag [#allocation4], %s220
          %s222 = sand.u32 %s32, 1
          %s223 = smul.addr %s222, 256
          %s224 = scalar_lea.vmem [#allocation3], %s223
          %226 = vsyncadd %s221, 0
          %s227 = smul.addr %s22, 32
          %s228 = smul.addr %s227, 8
          %s229 = scalar_lea.hbm %s0, %s228
          %s230 = sshll.u32 %s229, 4
          %s231 = int_to_ptr.hbm [resolvable:$true] %s230
          %s232 = sshll.u32 %s224, 4
          %s233 = int_to_ptr.vmem [resolvable:$true] %s232
          %238 = dma.hbm_to_vmem [thread:$0]  %s231, 4096, %s233, %s221, 128, 128, 8
        $region32: #{tpu_custom_call.1} parent=27 // pred_fallthru
          _
      $region28: #{tpu_custom_call.1} parent=5 // pred_fallthru
        _
      %p239 = scmp.le.s32.totalorder 1, %s22
      %p240 = scmp.lt.s32.totalorder %s22, 3
      %p241 = pnand %p239, %p240
      %p242 = pneg %p241
      // Predicated region
      $region33: #{tpu_custom_call.1} parent=5 // pred_check
        _
      $region34: #{tpu_custom_call.1} parent=5 // pred_check_branch
        %244 = sbr.rel (%p241) target = $region36
      $region35: #{tpu_custom_call.1} parent=5 // pred_region
        %s245 = ssub.s32 %s22, 1
        %s246 = sand.u32 %s35, 1
        %s247 = scalar_lea.sflag [#allocation4], %s246
        %s248 = sand.u32 %s35, 1
        %s249 = smul.addr %s248, 256
        %s250 = scalar_lea.vmem [#allocation3], %s249
        // Predicated region
        $region37: #{tpu_custom_call.1} parent=35 // pred_check
          %p251 = pneg %p48
        $region38: #{tpu_custom_call.1} parent=35 // pred_check_branch
          %253 = sbr.rel (%p251) target = $region40
        $region39: #{tpu_custom_call.1} parent=35 // pred_region
          %255 = dma.done %s247, 4096
        $region40: #{tpu_custom_call.1} parent=35 // pred_fallthru
          _
        %s256 = sand.u32 %s35, 1
        %s257 = scalar_lea.sflag [#allocation4], %s256
        %s258 = sand.u32 %s35, 1
        %s259 = smul.addr %s258, 256
        %s260 = scalar_lea.vmem [#allocation3], %s259
        %p261 = pneg %p48
        %p262 = pneg %p45
        %p263 = pneg %p69
        %p264 = pneg %p66
        %p265 = pneg %p90
        %p266 = pneg %p87
        %p267 = pneg %p111
        %p268 = pneg %p108
        %p269 = pneg %p137
        %p270 = pneg %p134
        %s271 = sand.u32 %s124, 1
        %s272 = scalar_lea.sflag [#allocation5], %s271
        %s273 = sand.u32 %s124, 1
        %s274 = smul.addr %s273, 256
        %s275 = scalar_lea.vmem [#allocation6], %s274
        %p276 = pneg %p163
        %p277 = pneg %p160
        %s278 = sand.u32 %s27, 1
        %s279 = scalar_lea.sflag [#allocation8], %s278
        %s280 = sand.u32 %s150, 1
        %s281 = scalar_lea.vmem [#allocation7], %s280
        %p282 = pneg %p189
        %p283 = pneg %p186
        %s284 = sand.u32 %s27, 1
        %s285 = scalar_lea.sflag [#allocation8], %s284
        %s286 = sand.u32 %s176, 1
        %s287 = scalar_lea.vmem [#allocation9], %s286
        %v289 = vld [vmem:[%s250] sm:$0xff]
        %v290 = vld [vmem:[%s250 + $0x8] sm:$0xff]
        %v291 = vld [vmem:[%s250 + $0x10] sm:$0xff]
        %v292 = vld [vmem:[%s250 + $0x18] sm:$0xff]
        %v293 = vld [vmem:[%s250 + $0x20] sm:$0xff]
        %v294 = vld [vmem:[%s250 + $0x28] sm:$0xff]
        %v295 = vld [vmem:[%s250 + $0x30] sm:$0xff]
        %v296 = vld [vmem:[%s250 + $0x38] sm:$0xff]
        %v297 = vld [vmem:[%s250 + $0x40] sm:$0xff]
        %v298 = vld [vmem:[%s250 + $0x48] sm:$0xff]
        %v299 = vld [vmem:[%s250 + $0x50] sm:$0xff]
        %v300 = vld [vmem:[%s250 + $0x58] sm:$0xff]
        %v301 = vld [vmem:[%s250 + $0x60] sm:$0xff]
        %v302 = vld [vmem:[%s250 + $0x68] sm:$0xff]
        %v303 = vld [vmem:[%s250 + $0x70] sm:$0xff]
        %v304 = vld [vmem:[%s250 + $0x78] sm:$0xff]
        %v305 = vld [vmem:[%s250 + $0x80] sm:$0xff]
        %v306 = vld [vmem:[%s250 + $0x88] sm:$0xff]
        %v307 = vld [vmem:[%s250 + $0x90] sm:$0xff]
        %v308 = vld [vmem:[%s250 + $0x98] sm:$0xff]
        %v309 = vld [vmem:[%s250 + $0xa0] sm:$0xff]
        %v310 = vld [vmem:[%s250 + $0xa8] sm:$0xff]
        %v311 = vld [vmem:[%s250 + $0xb0] sm:$0xff]
        %v312 = vld [vmem:[%s250 + $0xb8] sm:$0xff]
        %v313 = vld [vmem:[%s250 + $0xc0] sm:$0xff]
        %v314 = vld [vmem:[%s250 + $0xc8] sm:$0xff]
        %v315 = vld [vmem:[%s250 + $0xd0] sm:$0xff]
        %v316 = vld [vmem:[%s250 + $0xd8] sm:$0xff]
        %v317 = vld [vmem:[%s250 + $0xe0] sm:$0xff]
        %v318 = vld [vmem:[%s250 + $0xe8] sm:$0xff]
        %v319 = vld [vmem:[%s250 + $0xf0] sm:$0xff]
        %v320 = vld [vmem:[%s250 + $0xf8] sm:$0xff]
        %v321 = vld [vmem:[%s1] sm:$0x1]
        %v323 = vperm.slane %v321, 0
        %v325 = vmul.f32 %v289, %v323
        %v326 = vmul.f32 %v290, %v323
        %v327 = vmul.f32 %v291, %v323
        %v328 = vmul.f32 %v292, %v323
        %v329 = vmul.f32 %v293, %v323
        %v330 = vmul.f32 %v294, %v323
        %v331 = vmul.f32 %v295, %v323
        %v332 = vmul.f32 %v296, %v323
        %v333 = vmul.f32 %v297, %v323
        %v334 = vmul.f32 %v298, %v323
        %v335 = vmul.f32 %v299, %v323
        %v336 = vmul.f32 %v300, %v323
        %v337 = vmul.f32 %v301, %v323
        %v338 = vmul.f32 %v302, %v323
        %v339 = vmul.f32 %v303, %v323
        %v340 = vmul.f32 %v304, %v323
        %v341 = vmul.f32 %v305, %v323
        %v342 = vmul.f32 %v306, %v323
        %v343 = vmul.f32 %v307, %v323
        %v344 = vmul.f32 %v308, %v323
        %v345 = vmul.f32 %v309, %v323
        %v346 = vmul.f32 %v310, %v323
        %v347 = vmul.f32 %v311, %v323
        %v348 = vmul.f32 %v312, %v323
        %v349 = vmul.f32 %v313, %v323
        %v350 = vmul.f32 %v314, %v323
        %v351 = vmul.f32 %v315, %v323
        %v352 = vmul.f32 %v316, %v323
        %v353 = vmul.f32 %v317, %v323
        %v354 = vmul.f32 %v318, %v323
        %v355 = vmul.f32 %v319, %v323
        %v356 = vmul.f32 %v320, %v323
        %v357 = vld [vmem:[%s2] sm:$0x1]
        %v359 = vperm.slane %v357, 0
        %v361 = vadd.f32 %v325, %v359
        %v362 = vadd.f32 %v326, %v359
        %v363 = vadd.f32 %v327, %v359
        %v364 = vadd.f32 %v328, %v359
        %v365 = vadd.f32 %v329, %v359
        %v366 = vadd.f32 %v330, %v359
        %v367 = vadd.f32 %v331, %v359
        %v368 = vadd.f32 %v332, %v359
        %v369 = vadd.f32 %v333, %v359
        %v370 = vadd.f32 %v334, %v359
        %v371 = vadd.f32 %v335, %v359
        %v372 = vadd.f32 %v336, %v359
        %v373 = vadd.f32 %v337, %v359
        %v374 = vadd.f32 %v338, %v359
        %v375 = vadd.f32 %v339, %v359
        %v376 = vadd.f32 %v340, %v359
        %v377 = vadd.f32 %v341, %v359
        %v378 = vadd.f32 %v342, %v359
        %v379 = vadd.f32 %v343, %v359
        %v380 = vadd.f32 %v344, %v359
        %v381 = vadd.f32 %v345, %v359
        %v382 = vadd.f32 %v346, %v359
        %v383 = vadd.f32 %v347, %v359
        %v384 = vadd.f32 %v348, %v359
        %v385 = vadd.f32 %v349, %v359
        %v386 = vadd.f32 %v350, %v359
        %v387 = vadd.f32 %v351, %v359
        %v388 = vadd.f32 %v352, %v359
        %v389 = vadd.f32 %v353, %v359
        %v390 = vadd.f32 %v354, %v359
        %v391 = vadd.f32 %v355, %v359
        %v392 = vadd.f32 %v356, %v359
        %vm393 = vcmask 261120
        %394 = vst.msk [vmem:[#allocation2] sm:$0xff] %vm393, 0.0
        %395 = vst.msk [vmem:[#allocation2 + $0x8] sm:$0xff] %vm393, 0.0
        %vm396 = vcmask 254976
        %397 = vst.msk [vmem:[#allocation2 + $0x10] sm:$0x3] %vm396, 0.0
        %398 = vst.msk [vmem:[#allocation2 + $0x18] sm:$0xff] %vm393, 0.0
        %399 = vst.msk [vmem:[#allocation2 + $0x20] sm:$0xff] %vm393, 0.0
        %400 = vst.msk [vmem:[#allocation2 + $0x28] sm:$0x3] %vm396, 0.0
        %401 = vst.msk [vmem:[#allocation2 + $0x30] sm:$0xff] %vm393, 0.0
        %402 = vst.msk [vmem:[#allocation2 + $0x38] sm:$0xff] %vm393, 0.0
        %403 = vst.msk [vmem:[#allocation2 + $0x40] sm:$0x3] %vm396, 0.0
        %404 = vst.msk [vmem:[#allocation2 + $0x48] sm:$0xff] %vm393, 0.0
        %405 = vst.msk [vmem:[#allocation2 + $0x50] sm:$0xff] %vm393, 0.0
        %406 = vst.msk [vmem:[#allocation2 + $0x58] sm:$0x3] %vm396, 0.0
        %407 = vst.msk [vmem:[#allocation2 + $0x60] sm:$0xff] %vm393, 0.0
        %408 = vst.msk [vmem:[#allocation2 + $0x68] sm:$0xff] %vm393, 0.0
        %409 = vst.msk [vmem:[#allocation2 + $0x70] sm:$0x3] %vm396, 0.0
        %410 = vst.msk [vmem:[#allocation2 + $0x78] sm:$0xff] %vm393, 0.0
        %411 = vst.msk [vmem:[#allocation2 + $0x80] sm:$0xff] %vm393, 0.0
        %412 = vst.msk [vmem:[#allocation2 + $0x88] sm:$0x3] %vm396, 0.0
        %413 = vst.msk [vmem:[#allocation2 + $0x90] sm:$0xff] %vm393, 0.0
        %414 = vst.msk [vmem:[#allocation2 + $0x98] sm:$0xff] %vm393, 0.0
        %415 = vst.msk [vmem:[#allocation2 + $0xa0] sm:$0x3] %vm396, 0.0
        %416 = vst.msk [vmem:[#allocation2 + $0xa8] sm:$0xff] %vm393, 0.0
        %417 = vst.msk [vmem:[#allocation2 + $0xb0] sm:$0xff] %vm393, 0.0
        %418 = vst.msk [vmem:[#allocation2 + $0xb8] sm:$0x3] %vm396, 0.0
        %419 = vst.msk [vmem:[#allocation2 + $0xc0] sm:$0xff] %vm393, 0.0
        %420 = vst.msk [vmem:[#allocation2 + $0xc8] sm:$0xff] %vm393, 0.0
        %421 = vst.msk [vmem:[#allocation2 + $0xd0] sm:$0x3] %vm396, 0.0
        %422 = vst.msk [vmem:[#allocation2 + $0xd8] sm:$0xff] %vm393, 0.0
        %423 = vst.msk [vmem:[#allocation2 + $0xe0] sm:$0xff] %vm393, 0.0
        %424 = vst.msk [vmem:[#allocation2 + $0xe8] sm:$0x3] %vm396, 0.0
        %425 = vst.msk [vmem:[#allocation2 + $0xf0] sm:$0xff] %vm393, 0.0
        %426 = vst.msk [vmem:[#allocation2 + $0xf8] sm:$0xff] %vm393, 0.0
        %427 = vst.msk [vmem:[#allocation2 + $0x100] sm:$0x3] %vm396, 0.0
        %428 = vst.msk [vmem:[#allocation2 + $0x108] sm:$0xff] %vm393, 0.0
        %429 = vst.msk [vmem:[#allocation2 + $0x110] sm:$0xff] %vm393, 0.0
        %430 = vst.msk [vmem:[#allocation2 + $0x118] sm:$0x3] %vm396, 0.0
        %431 = vst.msk [vmem:[#allocation2 + $0x120] sm:$0xff] %vm393, 0.0
        %432 = vst.msk [vmem:[#allocation2 + $0x128] sm:$0xff] %vm393, 0.0
        %433 = vst.msk [vmem:[#allocation2 + $0x130] sm:$0x3] %vm396, 0.0
        %434 = vst.msk [vmem:[#allocation2 + $0x138] sm:$0xff] %vm393, 0.0
        %435 = vst.msk [vmem:[#allocation2 + $0x140] sm:$0xff] %vm393, 0.0
        %436 = vst.msk [vmem:[#allocation2 + $0x148] sm:$0x3] %vm396, 0.0
        %437 = vst.msk [vmem:[#allocation2 + $0x150] sm:$0xff] %vm393, 0.0
        %438 = vst.msk [vmem:[#allocation2 + $0x158] sm:$0xff] %vm393, 0.0
        %439 = vst.msk [vmem:[#allocation2 + $0x160] sm:$0x3] %vm396, 0.0
        %440 = vst.msk [vmem:[#allocation2 + $0x168] sm:$0xff] %vm393, 0.0
        %441 = vst.msk [vmem:[#allocation2 + $0x170] sm:$0xff] %vm393, 0.0
        %442 = vst.msk [vmem:[#allocation2 + $0x178] sm:$0x3] %vm396, 0.0
        %443 = vst.msk [vmem:[#allocation2 + $0x180] sm:$0xff] %vm393, 0.0
        %444 = vst.msk [vmem:[#allocation2 + $0x188] sm:$0xff] %vm393, 0.0
        %445 = vst.msk [vmem:[#allocation2 + $0x190] sm:$0x3] %vm396, 0.0
        %446 = vst.msk [vmem:[#allocation2 + $0x198] sm:$0xff] %vm393, 0.0
        %447 = vst.msk [vmem:[#allocation2 + $0x1a0] sm:$0xff] %vm393, 0.0
        %448 = vst.msk [vmem:[#allocation2 + $0x1a8] sm:$0x3] %vm396, 0.0
        %s449 = scalar_lea.vmem [#allocation2], 24
        %450 = vst.msk [vmem:[%s449 + $0x1] sm:$0xff] %vm393, %v361
        %451 = vst.msk [vmem:[%s449 + $0x9] sm:$0xff] %vm393, %v362
        %452 = vst.msk [vmem:[%s449 + $0x19] sm:$0xff] %vm393, %v363
        %453 = vst.msk [vmem:[%s449 + $0x21] sm:$0xff] %vm393, %v364
        %454 = vst.msk [vmem:[%s449 + $0x31] sm:$0xff] %vm393, %v365
        %455 = vst.msk [vmem:[%s449 + $0x39] sm:$0xff] %vm393, %v366
        %456 = vst.msk [vmem:[%s449 + $0x49] sm:$0xff] %vm393, %v367
        %457 = vst.msk [vmem:[%s449 + $0x51] sm:$0xff] %vm393, %v368
        %458 = vst.msk [vmem:[%s449 + $0x61] sm:$0xff] %vm393, %v369
        %459 = vst.msk [vmem:[%s449 + $0x69] sm:$0xff] %vm393, %v370
        %460 = vst.msk [vmem:[%s449 + $0x79] sm:$0xff] %vm393, %v371
        %461 = vst.msk [vmem:[%s449 + $0x81] sm:$0xff] %vm393, %v372
        %462 = vst.msk [vmem:[%s449 + $0x91] sm:$0xff] %vm393, %v373
        %463 = vst.msk [vmem:[%s449 + $0x99] sm:$0xff] %vm393, %v374
        %464 = vst.msk [vmem:[%s449 + $0xa9] sm:$0xff] %vm393, %v375
        %465 = vst.msk [vmem:[%s449 + $0xb1] sm:$0xff] %vm393, %v376
        %466 = vst.msk [vmem:[%s449 + $0xc1] sm:$0xff] %vm393, %v377
        %467 = vst.msk [vmem:[%s449 + $0xc9] sm:$0xff] %vm393, %v378
        %468 = vst.msk [vmem:[%s449 + $0xd9] sm:$0xff] %vm393, %v379
        %469 = vst.msk [vmem:[%s449 + $0xe1] sm:$0xff] %vm393, %v380
        %470 = vst.msk [vmem:[%s449 + $0xf1] sm:$0xff] %vm393, %v381
        %471 = vst.msk [vmem:[%s449 + $0xf9] sm:$0xff] %vm393, %v382
        %472 = vst.msk [vmem:[%s449 + $0x109] sm:$0xff] %vm393, %v383
        %473 = vst.msk [vmem:[%s449 + $0x111] sm:$0xff] %vm393, %v384
        %474 = vst.msk [vmem:[%s449 + $0x121] sm:$0xff] %vm393, %v385
        %475 = vst.msk [vmem:[%s449 + $0x129] sm:$0xff] %vm393, %v386
        %476 = vst.msk [vmem:[%s449 + $0x139] sm:$0xff] %vm393, %v387
        %477 = vst.msk [vmem:[%s449 + $0x141] sm:$0xff] %vm393, %v388
        %478 = vst.msk [vmem:[%s449 + $0x151] sm:$0xff] %vm393, %v389
        %479 = vst.msk [vmem:[%s449 + $0x159] sm:$0xff] %vm393, %v390
        %480 = vst.msk [vmem:[%s449 + $0x169] sm:$0xff] %vm393, %v391
        %481 = vst.msk [vmem:[%s449 + $0x171] sm:$0xff] %vm393, %v392
        %v482 = vld [vmem:[#allocation2] sm:$0xff]
        %v483 = vld [vmem:[#allocation2 + $0x8] sm:$0xff]
        %v484 = vld [vmem:[#allocation2 + $0x18] sm:$0xff]
        %v485 = vld [vmem:[#allocation2 + $0x20] sm:$0xff]
        %v486 = vld [vmem:[#allocation2 + $0x30] sm:$0xff]
        %v487 = vld [vmem:[#allocation2 + $0x38] sm:$0xff]
        %v488 = vld [vmem:[#allocation2 + $0x48] sm:$0xff]
        %v489 = vld [vmem:[#allocation2 + $0x50] sm:$0xff]
        %v490 = vld [vmem:[#allocation2 + $0x60] sm:$0xff]
        %v491 = vld [vmem:[#allocation2 + $0x68] sm:$0xff]
        %v492 = vld [vmem:[#allocation2 + $0x78] sm:$0xff]
        %v493 = vld [vmem:[#allocation2 + $0x80] sm:$0xff]
        %v494 = vld [vmem:[#allocation2 + $0x90] sm:$0xff]
        %v495 = vld [vmem:[#allocation2 + $0x98] sm:$0xff]
        %v496 = vld [vmem:[#allocation2 + $0xa8] sm:$0xff]
        %v497 = vld [vmem:[#allocation2 + $0xb0] sm:$0xff]
        %v498 = vld [vmem:[#allocation2 + $0xc0] sm:$0xff]
        %v499 = vld [vmem:[#allocation2 + $0xc8] sm:$0xff]
        %v500 = vld [vmem:[#allocation2 + $0xd8] sm:$0xff]
        %v501 = vld [vmem:[#allocation2 + $0xe0] sm:$0xff]
        %v502 = vld [vmem:[#allocation2 + $0xf0] sm:$0xff]
        %v503 = vld [vmem:[#allocation2 + $0xf8] sm:$0xff]
        %v504 = vld [vmem:[#allocation2 + $0x108] sm:$0xff]
        %v505 = vld [vmem:[#allocation2 + $0x110] sm:$0xff]
        %v506 = vld [vmem:[#allocation2 + $0x120] sm:$0xff]
        %v507 = vld [vmem:[#allocation2 + $0x128] sm:$0xff]
        %v508 = vld [vmem:[#allocation2 + $0x138] sm:$0xff]
        %v509 = vld [vmem:[#allocation2 + $0x140] sm:$0xff]
        %v510 = vld [vmem:[#allocation2 + $0x150] sm:$0xff]
        %v511 = vld [vmem:[#allocation2 + $0x158] sm:$0xff]
        %v512 = vld [vmem:[#allocation2 + $0x168] sm:$0xff]
        %v513 = vld [vmem:[#allocation2 + $0x170] sm:$0xff]
        %v514 = vld [vmem:[#allocation2 + $0x1] sm:$0xff]
        %v515 = vld [vmem:[#allocation2 + $0x9] sm:$0xff]
        %v516 = vld [vmem:[#allocation2 + $0x19] sm:$0xff]
        %v517 = vld [vmem:[#allocation2 + $0x21] sm:$0xff]
        %v518 = vld [vmem:[#allocation2 + $0x31] sm:$0xff]
        %v519 = vld [vmem:[#allocation2 + $0x39] sm:$0xff]
        %v520 = vld [vmem:[#allocation2 + $0x49] sm:$0xff]
        %v521 = vld [vmem:[#allocation2 + $0x51] sm:$0xff]
        %v522 = vld [vmem:[#allocation2 + $0x61] sm:$0xff]
        %v523 = vld [vmem:[#allocation2 + $0x69] sm:$0xff]
        %v524 = vld [vmem:[#allocation2 + $0x79] sm:$0xff]
        %v525 = vld [vmem:[#allocation2 + $0x81] sm:$0xff]
        %v526 = vld [vmem:[#allocation2 + $0x91] sm:$0xff]
        %v527 = vld [vmem:[#allocation2 + $0x99] sm:$0xff]
        %v528 = vld [vmem:[#allocation2 + $0xa9] sm:$0xff]
        %v529 = vld [vmem:[#allocation2 + $0xb1] sm:$0xff]
        %v530 = vld [vmem:[#allocation2 + $0xc1] sm:$0xff]
        %v531 = vld [vmem:[#allocation2 + $0xc9] sm:$0xff]
        %v532 = vld [vmem:[#allocation2 + $0xd9] sm:$0xff]
        %v533 = vld [vmem:[#allocation2 + $0xe1] sm:$0xff]
        %v534 = vld [vmem:[#allocation2 + $0xf1] sm:$0xff]
        %v535 = vld [vmem:[#allocation2 + $0xf9] sm:$0xff]
        %v536 = vld [vmem:[#allocation2 + $0x109] sm:$0xff]
        %v537 = vld [vmem:[#allocation2 + $0x111] sm:$0xff]
        %v538 = vld [vmem:[#allocation2 + $0x121] sm:$0xff]
        %v539 = vld [vmem:[#allocation2 + $0x129] sm:$0xff]
        %v540 = vld [vmem:[#allocation2 + $0x139] sm:$0xff]
        %v541 = vld [vmem:[#allocation2 + $0x141] sm:$0xff]
        %v542 = vld [vmem:[#allocation2 + $0x151] sm:$0xff]
        %v543 = vld [vmem:[#allocation2 + $0x159] sm:$0xff]
        %v544 = vld [vmem:[#allocation2 + $0x169] sm:$0xff]
        %v545 = vld [vmem:[#allocation2 + $0x171] sm:$0xff]
        %v546 = vld [vmem:[#allocation2 + $0x2] sm:$0xff]
        %v547 = vld [vmem:[#allocation2 + $0xa] sm:$0xff]
        %v548 = vld [vmem:[#allocation2 + $0x1a] sm:$0xff]
        %v549 = vld [vmem:[#allocation2 + $0x22] sm:$0xff]
        %v550 = vld [vmem:[#allocation2 + $0x32] sm:$0xff]
        %v551 = vld [vmem:[#allocation2 + $0x3a] sm:$0xff]
        %v552 = vld [vmem:[#allocation2 + $0x4a] sm:$0xff]
        %v553 = vld [vmem:[#allocation2 + $0x52] sm:$0xff]
        %v554 = vld [vmem:[#allocation2 + $0x62] sm:$0xff]
        %v555 = vld [vmem:[#allocation2 + $0x6a] sm:$0xff]
        %v556 = vld [vmem:[#allocation2 + $0x7a] sm:$0xff]
        %v557 = vld [vmem:[#allocation2 + $0x82] sm:$0xff]
        %v558 = vld [vmem:[#allocation2 + $0x92] sm:$0xff]
        %v559 = vld [vmem:[#allocation2 + $0x9a] sm:$0xff]
        %v560 = vld [vmem:[#allocation2 + $0xaa] sm:$0xff]
        %v561 = vld [vmem:[#allocation2 + $0xb2] sm:$0xff]
        %v562 = vld [vmem:[#allocation2 + $0xc2] sm:$0xff]
        %v563 = vld [vmem:[#allocation2 + $0xca] sm:$0xff]
        %v564 = vld [vmem:[#allocation2 + $0xda] sm:$0xff]
        %v565 = vld [vmem:[#allocation2 + $0xe2] sm:$0xff]
        %v566 = vld [vmem:[#allocation2 + $0xf2] sm:$0xff]
        %v567 = vld [vmem:[#allocation2 + $0xfa] sm:$0xff]
        %v568 = vld [vmem:[#allocation2 + $0x10a] sm:$0xff]
        %v569 = vld [vmem:[#allocation2 + $0x112] sm:$0xff]
        %v570 = vld [vmem:[#allocation2 + $0x122] sm:$0xff]
        %v571 = vld [vmem:[#allocation2 + $0x12a] sm:$0xff]
        %v572 = vld [vmem:[#allocation2 + $0x13a] sm:$0xff]
        %v573 = vld [vmem:[#allocation2 + $0x142] sm:$0xff]
        %v574 = vld [vmem:[#allocation2 + $0x152] sm:$0xff]
        %v575 = vld [vmem:[#allocation2 + $0x15a] sm:$0xff]
        %v576 = vld [vmem:[#allocation2 + $0x16a] sm:$0xff]
        %v577 = vld [vmem:[#allocation2 + $0x172] sm:$0xff]
        %v578 = vld [vmem:[%s449] sm:$0xff]
        %v579 = vld [vmem:[%s449 + $0x8] sm:$0xff]
        %v580 = vld [vmem:[%s449 + $0x18] sm:$0xff]
        %v581 = vld [vmem:[%s449 + $0x20] sm:$0xff]
        %v582 = vld [vmem:[%s449 + $0x30] sm:$0xff]
        %v583 = vld [vmem:[%s449 + $0x38] sm:$0xff]
        %v584 = vld [vmem:[%s449 + $0x48] sm:$0xff]
        %v585 = vld [vmem:[%s449 + $0x50] sm:$0xff]
        %v586 = vld [vmem:[%s449 + $0x60] sm:$0xff]
        %v587 = vld [vmem:[%s449 + $0x68] sm:$0xff]
        %v588 = vld [vmem:[%s449 + $0x78] sm:$0xff]
        %v589 = vld [vmem:[%s449 + $0x80] sm:$0xff]
        %v590 = vld [vmem:[%s449 + $0x90] sm:$0xff]
        %v591 = vld [vmem:[%s449 + $0x98] sm:$0xff]
        %v592 = vld [vmem:[%s449 + $0xa8] sm:$0xff]
        %v593 = vld [vmem:[%s449 + $0xb0] sm:$0xff]
        %v594 = vld [vmem:[%s449 + $0xc0] sm:$0xff]
        %v595 = vld [vmem:[%s449 + $0xc8] sm:$0xff]
        %v596 = vld [vmem:[%s449 + $0xd8] sm:$0xff]
        %v597 = vld [vmem:[%s449 + $0xe0] sm:$0xff]
        %v598 = vld [vmem:[%s449 + $0xf0] sm:$0xff]
        %v599 = vld [vmem:[%s449 + $0xf8] sm:$0xff]
        %v600 = vld [vmem:[%s449 + $0x108] sm:$0xff]
        %v601 = vld [vmem:[%s449 + $0x110] sm:$0xff]
        %v602 = vld [vmem:[%s449 + $0x120] sm:$0xff]
        %v603 = vld [vmem:[%s449 + $0x128] sm:$0xff]
        %v604 = vld [vmem:[%s449 + $0x138] sm:$0xff]
        %v605 = vld [vmem:[%s449 + $0x140] sm:$0xff]
        %v606 = vld [vmem:[%s449 + $0x150] sm:$0xff]
        %v607 = vld [vmem:[%s449 + $0x158] sm:$0xff]
        %v608 = vld [vmem:[%s449 + $0x168] sm:$0xff]
        %v609 = vld [vmem:[%s449 + $0x170] sm:$0xff]
        %v610 = vld [vmem:[%s449 + $0x1] sm:$0xff]
        %v611 = vld [vmem:[%s449 + $0x9] sm:$0xff]
        %v612 = vld [vmem:[%s449 + $0x19] sm:$0xff]
        %v613 = vld [vmem:[%s449 + $0x21] sm:$0xff]
        %v614 = vld [vmem:[%s449 + $0x31] sm:$0xff]
        %v615 = vld [vmem:[%s449 + $0x39] sm:$0xff]
        %v616 = vld [vmem:[%s449 + $0x49] sm:$0xff]
        %v617 = vld [vmem:[%s449 + $0x51] sm:$0xff]
        %v618 = vld [vmem:[%s449 + $0x61] sm:$0xff]
        %v619 = vld [vmem:[%s449 + $0x69] sm:$0xff]
        %v620 = vld [vmem:[%s449 + $0x79] sm:$0xff]
        %v621 = vld [vmem:[%s449 + $0x81] sm:$0xff]
        %v622 = vld [vmem:[%s449 + $0x91] sm:$0xff]
        %v623 = vld [vmem:[%s449 + $0x99] sm:$0xff]
        %v624 = vld [vmem:[%s449 + $0xa9] sm:$0xff]
        %v625 = vld [vmem:[%s449 + $0xb1] sm:$0xff]
        %v626 = vld [vmem:[%s449 + $0xc1] sm:$0xff]
        %v627 = vld [vmem:[%s449 + $0xc9] sm:$0xff]
        %v628 = vld [vmem:[%s449 + $0xd9] sm:$0xff]
        %v629 = vld [vmem:[%s449 + $0xe1] sm:$0xff]
        %v630 = vld [vmem:[%s449 + $0xf1] sm:$0xff]
        %v631 = vld [vmem:[%s449 + $0xf9] sm:$0xff]
        %v632 = vld [vmem:[%s449 + $0x109] sm:$0xff]
        %v633 = vld [vmem:[%s449 + $0x111] sm:$0xff]
        %v634 = vld [vmem:[%s449 + $0x121] sm:$0xff]
        %v635 = vld [vmem:[%s449 + $0x129] sm:$0xff]
        %v636 = vld [vmem:[%s449 + $0x139] sm:$0xff]
        %v637 = vld [vmem:[%s449 + $0x141] sm:$0xff]
        %v638 = vld [vmem:[%s449 + $0x151] sm:$0xff]
        %v639 = vld [vmem:[%s449 + $0x159] sm:$0xff]
        %v640 = vld [vmem:[%s449 + $0x169] sm:$0xff]
        %v641 = vld [vmem:[%s449 + $0x171] sm:$0xff]
        %v642 = vld [vmem:[%s449 + $0x2] sm:$0xff]
        %v643 = vld [vmem:[%s449 + $0xa] sm:$0xff]
        %v644 = vld [vmem:[%s449 + $0x1a] sm:$0xff]
        %v645 = vld [vmem:[%s449 + $0x22] sm:$0xff]
        %v646 = vld [vmem:[%s449 + $0x32] sm:$0xff]
        %v647 = vld [vmem:[%s449 + $0x3a] sm:$0xff]
        %v648 = vld [vmem:[%s449 + $0x4a] sm:$0xff]
        %v649 = vld [vmem:[%s449 + $0x52] sm:$0xff]
        %v650 = vld [vmem:[%s449 + $0x62] sm:$0xff]
        %v651 = vld [vmem:[%s449 + $0x6a] sm:$0xff]
        %v652 = vld [vmem:[%s449 + $0x7a] sm:$0xff]
        %v653 = vld [vmem:[%s449 + $0x82] sm:$0xff]
        %v654 = vld [vmem:[%s449 + $0x92] sm:$0xff]
        %v655 = vld [vmem:[%s449 + $0x9a] sm:$0xff]
        %v656 = vld [vmem:[%s449 + $0xaa] sm:$0xff]
        %v657 = vld [vmem:[%s449 + $0xb2] sm:$0xff]
        %v658 = vld [vmem:[%s449 + $0xc2] sm:$0xff]
        %v659 = vld [vmem:[%s449 + $0xca] sm:$0xff]
        %v660 = vld [vmem:[%s449 + $0xda] sm:$0xff]
        %v661 = vld [vmem:[%s449 + $0xe2] sm:$0xff]
        %v662 = vld [vmem:[%s449 + $0xf2] sm:$0xff]
        %v663 = vld [vmem:[%s449 + $0xfa] sm:$0xff]
        %v664 = vld [vmem:[%s449 + $0x10a] sm:$0xff]
        %v665 = vld [vmem:[%s449 + $0x112] sm:$0xff]
        %v666 = vld [vmem:[%s449 + $0x122] sm:$0xff]
        %v667 = vld [vmem:[%s449 + $0x12a] sm:$0xff]
        %v668 = vld [vmem:[%s449 + $0x13a] sm:$0xff]
        %v669 = vld [vmem:[%s449 + $0x142] sm:$0xff]
        %v670 = vld [vmem:[%s449 + $0x152] sm:$0xff]
        %v671 = vld [vmem:[%s449 + $0x15a] sm:$0xff]
        %v672 = vld [vmem:[%s449 + $0x16a] sm:$0xff]
        %v673 = vld [vmem:[%s449 + $0x172] sm:$0xff]
        %s674 = scalar_lea.vmem [#allocation2], 48
        %v675 = vld [vmem:[%s674] sm:$0xff]
        %v676 = vld [vmem:[%s674 + $0x8] sm:$0xff]
        %v677 = vld [vmem:[%s674 + $0x18] sm:$0xff]
        %v678 = vld [vmem:[%s674 + $0x20] sm:$0xff]
        %v679 = vld [vmem:[%s674 + $0x30] sm:$0xff]
        %v680 = vld [vmem:[%s674 + $0x38] sm:$0xff]
        %v681 = vld [vmem:[%s674 + $0x48] sm:$0xff]
        %v682 = vld [vmem:[%s674 + $0x50] sm:$0xff]
        %v683 = vld [vmem:[%s674 + $0x60] sm:$0xff]
        %v684 = vld [vmem:[%s674 + $0x68] sm:$0xff]
        %v685 = vld [vmem:[%s674 + $0x78] sm:$0xff]
        %v686 = vld [vmem:[%s674 + $0x80] sm:$0xff]
        %v687 = vld [vmem:[%s674 + $0x90] sm:$0xff]
        %v688 = vld [vmem:[%s674 + $0x98] sm:$0xff]
        %v689 = vld [vmem:[%s674 + $0xa8] sm:$0xff]
        %v690 = vld [vmem:[%s674 + $0xb0] sm:$0xff]
        %v691 = vld [vmem:[%s674 + $0xc0] sm:$0xff]
        %v692 = vld [vmem:[%s674 + $0xc8] sm:$0xff]
        %v693 = vld [vmem:[%s674 + $0xd8] sm:$0xff]
        %v694 = vld [vmem:[%s674 + $0xe0] sm:$0xff]
        %v695 = vld [vmem:[%s674 + $0xf0] sm:$0xff]
        %v696 = vld [vmem:[%s674 + $0xf8] sm:$0xff]
        %v697 = vld [vmem:[%s674 + $0x108] sm:$0xff]
        %v698 = vld [vmem:[%s674 + $0x110] sm:$0xff]
        %v699 = vld [vmem:[%s674 + $0x120] sm:$0xff]
        %v700 = vld [vmem:[%s674 + $0x128] sm:$0xff]
        %v701 = vld [vmem:[%s674 + $0x138] sm:$0xff]
        %v702 = vld [vmem:[%s674 + $0x140] sm:$0xff]
        %v703 = vld [vmem:[%s674 + $0x150] sm:$0xff]
        %v704 = vld [vmem:[%s674 + $0x158] sm:$0xff]
        %v705 = vld [vmem:[%s674 + $0x168] sm:$0xff]
        %v706 = vld [vmem:[%s674 + $0x170] sm:$0xff]
        %v707 = vld [vmem:[%s674 + $0x1] sm:$0xff]
        %v708 = vld [vmem:[%s674 + $0x9] sm:$0xff]
        %v709 = vld [vmem:[%s674 + $0x19] sm:$0xff]
        %v710 = vld [vmem:[%s674 + $0x21] sm:$0xff]
        %v711 = vld [vmem:[%s674 + $0x31] sm:$0xff]
        %v712 = vld [vmem:[%s674 + $0x39] sm:$0xff]
        %v713 = vld [vmem:[%s674 + $0x49] sm:$0xff]
        %v714 = vld [vmem:[%s674 + $0x51] sm:$0xff]
        %v715 = vld [vmem:[%s674 + $0x61] sm:$0xff]
        %v716 = vld [vmem:[%s674 + $0x69] sm:$0xff]
        %v717 = vld [vmem:[%s674 + $0x79] sm:$0xff]
        %v718 = vld [vmem:[%s674 + $0x81] sm:$0xff]
        %v719 = vld [vmem:[%s674 + $0x91] sm:$0xff]
        %v720 = vld [vmem:[%s674 + $0x99] sm:$0xff]
        %v721 = vld [vmem:[%s674 + $0xa9] sm:$0xff]
        %v722 = vld [vmem:[%s674 + $0xb1] sm:$0xff]
        %v723 = vld [vmem:[%s674 + $0xc1] sm:$0xff]
        %v724 = vld [vmem:[%s674 + $0xc9] sm:$0xff]
        %v725 = vld [vmem:[%s674 + $0xd9] sm:$0xff]
        %v726 = vld [vmem:[%s674 + $0xe1] sm:$0xff]
        %v727 = vld [vmem:[%s674 + $0xf1] sm:$0xff]
        %v728 = vld [vmem:[%s674 + $0xf9] sm:$0xff]
        %v729 = vld [vmem:[%s674 + $0x109] sm:$0xff]
        %v730 = vld [vmem:[%s674 + $0x111] sm:$0xff]
        %v731 = vld [vmem:[%s674 + $0x121] sm:$0xff]
        %v732 = vld [vmem:[%s674 + $0x129] sm:$0xff]
        %v733 = vld [vmem:[%s674 + $0x139] sm:$0xff]
        %v734 = vld [vmem:[%s674 + $0x141] sm:$0xff]
        %v735 = vld [vmem:[%s674 + $0x151] sm:$0xff]
        %v736 = vld [vmem:[%s674 + $0x159] sm:$0xff]
        %v737 = vld [vmem:[%s674 + $0x169] sm:$0xff]
        %v738 = vld [vmem:[%s674 + $0x171] sm:$0xff]
        %v739 = vld [vmem:[%s674 + $0x2] sm:$0xff]
        %v740 = vld [vmem:[%s674 + $0xa] sm:$0xff]
        %v741 = vld [vmem:[%s674 + $0x1a] sm:$0xff]
        %v742 = vld [vmem:[%s674 + $0x22] sm:$0xff]
        %v743 = vld [vmem:[%s674 + $0x32] sm:$0xff]
        %v744 = vld [vmem:[%s674 + $0x3a] sm:$0xff]
        %v745 = vld [vmem:[%s674 + $0x4a] sm:$0xff]
        %v746 = vld [vmem:[%s674 + $0x52] sm:$0xff]
        %v747 = vld [vmem:[%s674 + $0x62] sm:$0xff]
        %v748 = vld [vmem:[%s674 + $0x6a] sm:$0xff]
        %v749 = vld [vmem:[%s674 + $0x7a] sm:$0xff]
        %v750 = vld [vmem:[%s674 + $0x82] sm:$0xff]
        %v751 = vld [vmem:[%s674 + $0x92] sm:$0xff]
        %v752 = vld [vmem:[%s674 + $0x9a] sm:$0xff]
        %v753 = vld [vmem:[%s674 + $0xaa] sm:$0xff]
        %v754 = vld [vmem:[%s674 + $0xb2] sm:$0xff]
        %v755 = vld [vmem:[%s674 + $0xc2] sm:$0xff]
        %v756 = vld [vmem:[%s674 + $0xca] sm:$0xff]
        %v757 = vld [vmem:[%s674 + $0xda] sm:$0xff]
        %v758 = vld [vmem:[%s674 + $0xe2] sm:$0xff]
        %v759 = vld [vmem:[%s674 + $0xf2] sm:$0xff]
        %v760 = vld [vmem:[%s674 + $0xfa] sm:$0xff]
        %v761 = vld [vmem:[%s674 + $0x10a] sm:$0xff]
        %v762 = vld [vmem:[%s674 + $0x112] sm:$0xff]
        %v763 = vld [vmem:[%s674 + $0x122] sm:$0xff]
        %v764 = vld [vmem:[%s674 + $0x12a] sm:$0xff]
        %v765 = vld [vmem:[%s674 + $0x13a] sm:$0xff]
        %v766 = vld [vmem:[%s674 + $0x142] sm:$0xff]
        %v767 = vld [vmem:[%s674 + $0x152] sm:$0xff]
        %v768 = vld [vmem:[%s674 + $0x15a] sm:$0xff]
        %v769 = vld [vmem:[%s674 + $0x16a] sm:$0xff]
        %v770 = vld [vmem:[%s674 + $0x172] sm:$0xff]
        %803 = vrot.lane.b32.xlu0 %v514, 32
        %v804 = vpop.permute.xlu0 %803
        %805 = vrot.lane.b32.xlu0 %v515, 32
        %v806 = vpop.permute.xlu0 %805
        %807 = vrot.lane.b32.xlu0 %v516, 32
        %v808 = vpop.permute.xlu0 %807
        %809 = vrot.lane.b32.xlu0 %v517, 32
        %v810 = vpop.permute.xlu0 %809
        %811 = vrot.lane.b32.xlu0 %v518, 32
        %v812 = vpop.permute.xlu0 %811
        %813 = vrot.lane.b32.xlu0 %v519, 32
        %v814 = vpop.permute.xlu0 %813
        %815 = vrot.lane.b32.xlu0 %v520, 32
        %v816 = vpop.permute.xlu0 %815
        %817 = vrot.lane.b32.xlu0 %v521, 32
        %v818 = vpop.permute.xlu0 %817
        %819 = vrot.lane.b32.xlu0 %v522, 32
        %v820 = vpop.permute.xlu0 %819
        %821 = vrot.lane.b32.xlu0 %v523, 32
        %v822 = vpop.permute.xlu0 %821
        %823 = vrot.lane.b32.xlu0 %v524, 32
        %v824 = vpop.permute.xlu0 %823
        %825 = vrot.lane.b32.xlu0 %v525, 32
        %v826 = vpop.permute.xlu0 %825
        %827 = vrot.lane.b32.xlu0 %v526, 32
        %v828 = vpop.permute.xlu0 %827
        %829 = vrot.lane.b32.xlu0 %v527, 32
        %v830 = vpop.permute.xlu0 %829
        %831 = vrot.lane.b32.xlu0 %v528, 32
        %v832 = vpop.permute.xlu0 %831
        %833 = vrot.lane.b32.xlu0 %v529, 32
        %v834 = vpop.permute.xlu0 %833
        %835 = vrot.lane.b32.xlu0 %v530, 32
        %v836 = vpop.permute.xlu0 %835
        %837 = vrot.lane.b32.xlu0 %v531, 32
        %v838 = vpop.permute.xlu0 %837
        %839 = vrot.lane.b32.xlu0 %v532, 32
        %v840 = vpop.permute.xlu0 %839
        %841 = vrot.lane.b32.xlu0 %v533, 32
        %v842 = vpop.permute.xlu0 %841
        %843 = vrot.lane.b32.xlu0 %v534, 32
        %v844 = vpop.permute.xlu0 %843
        %845 = vrot.lane.b32.xlu0 %v535, 32
        %v846 = vpop.permute.xlu0 %845
        %847 = vrot.lane.b32.xlu0 %v536, 32
        %v848 = vpop.permute.xlu0 %847
        %849 = vrot.lane.b32.xlu0 %v537, 32
        %v850 = vpop.permute.xlu0 %849
        %851 = vrot.lane.b32.xlu0 %v538, 32
        %v852 = vpop.permute.xlu0 %851
        %853 = vrot.lane.b32.xlu0 %v539, 32
        %v854 = vpop.permute.xlu0 %853
        %855 = vrot.lane.b32.xlu0 %v540, 32
        %v856 = vpop.permute.xlu0 %855
        %857 = vrot.lane.b32.xlu0 %v541, 32
        %v858 = vpop.permute.xlu0 %857
        %859 = vrot.lane.b32.xlu0 %v542, 32
        %v860 = vpop.permute.xlu0 %859
        %861 = vrot.lane.b32.xlu0 %v543, 32
        %v862 = vpop.permute.xlu0 %861
        %863 = vrot.lane.b32.xlu0 %v544, 32
        %v864 = vpop.permute.xlu0 %863
        %865 = vrot.lane.b32.xlu0 %v545, 32
        %v866 = vpop.permute.xlu0 %865
        %931 = vrot.lane.b32.xlu0 %v546, 64
        %v932 = vpop.permute.xlu0 %931
        %933 = vrot.lane.b32.xlu0 %v547, 64
        %v934 = vpop.permute.xlu0 %933
        %935 = vrot.lane.b32.xlu0 %v548, 64
        %v936 = vpop.permute.xlu0 %935
        %937 = vrot.lane.b32.xlu0 %v549, 64
        %v938 = vpop.permute.xlu0 %937
        %939 = vrot.lane.b32.xlu0 %v550, 64
        %v940 = vpop.permute.xlu0 %939
        %941 = vrot.lane.b32.xlu0 %v551, 64
        %v942 = vpop.permute.xlu0 %941
        %943 = vrot.lane.b32.xlu0 %v552, 64
        %v944 = vpop.permute.xlu0 %943
        %945 = vrot.lane.b32.xlu0 %v553, 64
        %v946 = vpop.permute.xlu0 %945
        %947 = vrot.lane.b32.xlu0 %v554, 64
        %v948 = vpop.permute.xlu0 %947
        %949 = vrot.lane.b32.xlu0 %v555, 64
        %v950 = vpop.permute.xlu0 %949
        %951 = vrot.lane.b32.xlu0 %v556, 64
        %v952 = vpop.permute.xlu0 %951
        %953 = vrot.lane.b32.xlu0 %v557, 64
        %v954 = vpop.permute.xlu0 %953
        %955 = vrot.lane.b32.xlu0 %v558, 64
        %v956 = vpop.permute.xlu0 %955
        %957 = vrot.lane.b32.xlu0 %v559, 64
        %v958 = vpop.permute.xlu0 %957
        %959 = vrot.lane.b32.xlu0 %v560, 64
        %v960 = vpop.permute.xlu0 %959
        %961 = vrot.lane.b32.xlu0 %v561, 64
        %v962 = vpop.permute.xlu0 %961
        %963 = vrot.lane.b32.xlu0 %v562, 64
        %v964 = vpop.permute.xlu0 %963
        %965 = vrot.lane.b32.xlu0 %v563, 64
        %v966 = vpop.permute.xlu0 %965
        %967 = vrot.lane.b32.xlu0 %v564, 64
        %v968 = vpop.permute.xlu0 %967
        %969 = vrot.lane.b32.xlu0 %v565, 64
        %v970 = vpop.permute.xlu0 %969
        %971 = vrot.lane.b32.xlu0 %v566, 64
        %v972 = vpop.permute.xlu0 %971
        %973 = vrot.lane.b32.xlu0 %v567, 64
        %v974 = vpop.permute.xlu0 %973
        %975 = vrot.lane.b32.xlu0 %v568, 64
        %v976 = vpop.permute.xlu0 %975
        %977 = vrot.lane.b32.xlu0 %v569, 64
        %v978 = vpop.permute.xlu0 %977
        %979 = vrot.lane.b32.xlu0 %v570, 64
        %v980 = vpop.permute.xlu0 %979
        %981 = vrot.lane.b32.xlu0 %v571, 64
        %v982 = vpop.permute.xlu0 %981
        %983 = vrot.lane.b32.xlu0 %v572, 64
        %v984 = vpop.permute.xlu0 %983
        %985 = vrot.lane.b32.xlu0 %v573, 64
        %v986 = vpop.permute.xlu0 %985
        %987 = vrot.lane.b32.xlu0 %v574, 64
        %v988 = vpop.permute.xlu0 %987
        %989 = vrot.lane.b32.xlu0 %v575, 64
        %v990 = vpop.permute.xlu0 %989
        %991 = vrot.lane.b32.xlu0 %v576, 64
        %v992 = vpop.permute.xlu0 %991
        %993 = vrot.lane.b32.xlu0 %v577, 64
        %v994 = vpop.permute.xlu0 %993
        %1059 = vrot.lane.b32.xlu0 %v578, 96
        %v1060 = vpop.permute.xlu0 %1059
        %1061 = vrot.lane.b32.xlu0 %v579, 96
        %v1062 = vpop.permute.xlu0 %1061
        %1063 = vrot.lane.b32.xlu0 %v580, 96
        %v1064 = vpop.permute.xlu0 %1063
        %1065 = vrot.lane.b32.xlu0 %v581, 96
        %v1066 = vpop.permute.xlu0 %1065
        %1067 = vrot.lane.b32.xlu0 %v582, 96
        %v1068 = vpop.permute.xlu0 %1067
        %1069 = vrot.lane.b32.xlu0 %v583, 96
        %v1070 = vpop.permute.xlu0 %1069
        %1071 = vrot.lane.b32.xlu0 %v584, 96
        %v1072 = vpop.permute.xlu0 %1071
        %1073 = vrot.lane.b32.xlu0 %v585, 96
        %v1074 = vpop.permute.xlu0 %1073
        %1075 = vrot.lane.b32.xlu0 %v586, 96
        %v1076 = vpop.permute.xlu0 %1075
        %1077 = vrot.lane.b32.xlu0 %v587, 96
        %v1078 = vpop.permute.xlu0 %1077
        %1079 = vrot.lane.b32.xlu0 %v588, 96
        %v1080 = vpop.permute.xlu0 %1079
        %1081 = vrot.lane.b32.xlu0 %v589, 96
        %v1082 = vpop.permute.xlu0 %1081
        %1083 = vrot.lane.b32.xlu0 %v590, 96
        %v1084 = vpop.permute.xlu0 %1083
        %1085 = vrot.lane.b32.xlu0 %v591, 96
        %v1086 = vpop.permute.xlu0 %1085
        %1087 = vrot.lane.b32.xlu0 %v592, 96
        %v1088 = vpop.permute.xlu0 %1087
        %1089 = vrot.lane.b32.xlu0 %v593, 96
        %v1090 = vpop.permute.xlu0 %1089
        %1091 = vrot.lane.b32.xlu0 %v594, 96
        %v1092 = vpop.permute.xlu0 %1091
        %1093 = vrot.lane.b32.xlu0 %v595, 96
        %v1094 = vpop.permute.xlu0 %1093
        %1095 = vrot.lane.b32.xlu0 %v596, 96
        %v1096 = vpop.permute.xlu0 %1095
        %1097 = vrot.lane.b32.xlu0 %v597, 96
        %v1098 = vpop.permute.xlu0 %1097
        %1099 = vrot.lane.b32.xlu0 %v598, 96
        %v1100 = vpop.permute.xlu0 %1099
        %1101 = vrot.lane.b32.xlu0 %v599, 96
        %v1102 = vpop.permute.xlu0 %1101
        %1103 = vrot.lane.b32.xlu0 %v600, 96
        %v1104 = vpop.permute.xlu0 %1103
        %1105 = vrot.lane.b32.xlu0 %v601, 96
        %v1106 = vpop.permute.xlu0 %1105
        %1107 = vrot.lane.b32.xlu0 %v602, 96
        %v1108 = vpop.permute.xlu0 %1107
        %1109 = vrot.lane.b32.xlu0 %v603, 96
        %v1110 = vpop.permute.xlu0 %1109
        %1111 = vrot.lane.b32.xlu0 %v604, 96
        %v1112 = vpop.permute.xlu0 %1111
        %1113 = vrot.lane.b32.xlu0 %v605, 96
        %v1114 = vpop.permute.xlu0 %1113
        %1115 = vrot.lane.b32.xlu0 %v606, 96
        %v1116 = vpop.permute.xlu0 %1115
        %1117 = vrot.lane.b32.xlu0 %v607, 96
        %v1118 = vpop.permute.xlu0 %1117
        %1119 = vrot.lane.b32.xlu0 %v608, 96
        %v1120 = vpop.permute.xlu0 %1119
        %1121 = vrot.lane.b32.xlu0 %v609, 96
        %v1122 = vpop.permute.xlu0 %1121
        %1187 = vrot.lane.b32.xlu0 %v642, 32
        %v1188 = vpop.permute.xlu0 %1187
        %1189 = vrot.lane.b32.xlu0 %v643, 32
        %v1190 = vpop.permute.xlu0 %1189
        %1191 = vrot.lane.b32.xlu0 %v644, 32
        %v1192 = vpop.permute.xlu0 %1191
        %1193 = vrot.lane.b32.xlu0 %v645, 32
        %v1194 = vpop.permute.xlu0 %1193
        %1195 = vrot.lane.b32.xlu0 %v646, 32
        %v1196 = vpop.permute.xlu0 %1195
        %1197 = vrot.lane.b32.xlu0 %v647, 32
        %v1198 = vpop.permute.xlu0 %1197
        %1199 = vrot.lane.b32.xlu0 %v648, 32
        %v1200 = vpop.permute.xlu0 %1199
        %1201 = vrot.lane.b32.xlu0 %v649, 32
        %v1202 = vpop.permute.xlu0 %1201
        %1203 = vrot.lane.b32.xlu0 %v650, 32
        %v1204 = vpop.permute.xlu0 %1203
        %1205 = vrot.lane.b32.xlu0 %v651, 32
        %v1206 = vpop.permute.xlu0 %1205
        %1207 = vrot.lane.b32.xlu0 %v652, 32
        %v1208 = vpop.permute.xlu0 %1207
        %1209 = vrot.lane.b32.xlu0 %v653, 32
        %v1210 = vpop.permute.xlu0 %1209
        %1211 = vrot.lane.b32.xlu0 %v654, 32
        %v1212 = vpop.permute.xlu0 %1211
        %1213 = vrot.lane.b32.xlu0 %v655, 32
        %v1214 = vpop.permute.xlu0 %1213
        %1215 = vrot.lane.b32.xlu0 %v656, 32
        %v1216 = vpop.permute.xlu0 %1215
        %1217 = vrot.lane.b32.xlu0 %v657, 32
        %v1218 = vpop.permute.xlu0 %1217
        %1219 = vrot.lane.b32.xlu0 %v658, 32
        %v1220 = vpop.permute.xlu0 %1219
        %1221 = vrot.lane.b32.xlu0 %v659, 32
        %v1222 = vpop.permute.xlu0 %1221
        %1223 = vrot.lane.b32.xlu0 %v660, 32
        %v1224 = vpop.permute.xlu0 %1223
        %1225 = vrot.lane.b32.xlu0 %v661, 32
        %v1226 = vpop.permute.xlu0 %1225
        %1227 = vrot.lane.b32.xlu0 %v662, 32
        %v1228 = vpop.permute.xlu0 %1227
        %1229 = vrot.lane.b32.xlu0 %v663, 32
        %v1230 = vpop.permute.xlu0 %1229
        %1231 = vrot.lane.b32.xlu0 %v664, 32
        %v1232 = vpop.permute.xlu0 %1231
        %1233 = vrot.lane.b32.xlu0 %v665, 32
        %v1234 = vpop.permute.xlu0 %1233
        %1235 = vrot.lane.b32.xlu0 %v666, 32
        %v1236 = vpop.permute.xlu0 %1235
        %1237 = vrot.lane.b32.xlu0 %v667, 32
        %v1238 = vpop.permute.xlu0 %1237
        %1239 = vrot.lane.b32.xlu0 %v668, 32
        %v1240 = vpop.permute.xlu0 %1239
        %1241 = vrot.lane.b32.xlu0 %v669, 32
        %v1242 = vpop.permute.xlu0 %1241
        %1243 = vrot.lane.b32.xlu0 %v670, 32
        %v1244 = vpop.permute.xlu0 %1243
        %1245 = vrot.lane.b32.xlu0 %v671, 32
        %v1246 = vpop.permute.xlu0 %1245
        %1247 = vrot.lane.b32.xlu0 %v672, 32
        %v1248 = vpop.permute.xlu0 %1247
        %1249 = vrot.lane.b32.xlu0 %v673, 32
        %v1250 = vpop.permute.xlu0 %1249
        %1315 = vrot.lane.b32.xlu0 %v675, 64
        %v1316 = vpop.permute.xlu0 %1315
        %1317 = vrot.lane.b32.xlu0 %v676, 64
        %v1318 = vpop.permute.xlu0 %1317
        %1319 = vrot.lane.b32.xlu0 %v677, 64
        %v1320 = vpop.permute.xlu0 %1319
        %1321 = vrot.lane.b32.xlu0 %v678, 64
        %v1322 = vpop.permute.xlu0 %1321
        %1323 = vrot.lane.b32.xlu0 %v679, 64
        %v1324 = vpop.permute.xlu0 %1323
        %1325 = vrot.lane.b32.xlu0 %v680, 64
        %v1326 = vpop.permute.xlu0 %1325
        %1327 = vrot.lane.b32.xlu0 %v681, 64
        %v1328 = vpop.permute.xlu0 %1327
        %1329 = vrot.lane.b32.xlu0 %v682, 64
        %v1330 = vpop.permute.xlu0 %1329
        %1331 = vrot.lane.b32.xlu0 %v683, 64
        %v1332 = vpop.permute.xlu0 %1331
        %1333 = vrot.lane.b32.xlu0 %v684, 64
        %v1334 = vpop.permute.xlu0 %1333
        %1335 = vrot.lane.b32.xlu0 %v685, 64
        %v1336 = vpop.permute.xlu0 %1335
        %1337 = vrot.lane.b32.xlu0 %v686, 64
        %v1338 = vpop.permute.xlu0 %1337
        %1339 = vrot.lane.b32.xlu0 %v687, 64
        %v1340 = vpop.permute.xlu0 %1339
        %1341 = vrot.lane.b32.xlu0 %v688, 64
        %v1342 = vpop.permute.xlu0 %1341
        %1343 = vrot.lane.b32.xlu0 %v689, 64
        %v1344 = vpop.permute.xlu0 %1343
        %1345 = vrot.lane.b32.xlu0 %v690, 64
        %v1346 = vpop.permute.xlu0 %1345
        %1347 = vrot.lane.b32.xlu0 %v691, 64
        %v1348 = vpop.permute.xlu0 %1347
        %1349 = vrot.lane.b32.xlu0 %v692, 64
        %v1350 = vpop.permute.xlu0 %1349
        %1351 = vrot.lane.b32.xlu0 %v693, 64
        %v1352 = vpop.permute.xlu0 %1351
        %1353 = vrot.lane.b32.xlu0 %v694, 64
        %v1354 = vpop.permute.xlu0 %1353
        %1355 = vrot.lane.b32.xlu0 %v695, 64
        %v1356 = vpop.permute.xlu0 %1355
        %1357 = vrot.lane.b32.xlu0 %v696, 64
        %v1358 = vpop.permute.xlu0 %1357
        %1359 = vrot.lane.b32.xlu0 %v697, 64
        %v1360 = vpop.permute.xlu0 %1359
        %1361 = vrot.lane.b32.xlu0 %v698, 64
        %v1362 = vpop.permute.xlu0 %1361
        %1363 = vrot.lane.b32.xlu0 %v699, 64
        %v1364 = vpop.permute.xlu0 %1363
        %1365 = vrot.lane.b32.xlu0 %v700, 64
        %v1366 = vpop.permute.xlu0 %1365
        %1367 = vrot.lane.b32.xlu0 %v701, 64
        %v1368 = vpop.permute.xlu0 %1367
        %1369 = vrot.lane.b32.xlu0 %v702, 64
        %v1370 = vpop.permute.xlu0 %1369
        %1371 = vrot.lane.b32.xlu0 %v703, 64
        %v1372 = vpop.permute.xlu0 %1371
        %1373 = vrot.lane.b32.xlu0 %v704, 64
        %v1374 = vpop.permute.xlu0 %1373
        %1375 = vrot.lane.b32.xlu0 %v705, 64
        %v1376 = vpop.permute.xlu0 %1375
        %1377 = vrot.lane.b32.xlu0 %v706, 64
        %v1378 = vpop.permute.xlu0 %1377
        %1443 = vrot.lane.b32.xlu0 %v707, 96
        %v1444 = vpop.permute.xlu0 %1443
        %1445 = vrot.lane.b32.xlu0 %v708, 96
        %v1446 = vpop.permute.xlu0 %1445
        %1447 = vrot.lane.b32.xlu0 %v709, 96
        %v1448 = vpop.permute.xlu0 %1447
        %1449 = vrot.lane.b32.xlu0 %v710, 96
        %v1450 = vpop.permute.xlu0 %1449
        %1451 = vrot.lane.b32.xlu0 %v711, 96
        %v1452 = vpop.permute.xlu0 %1451
        %1453 = vrot.lane.b32.xlu0 %v712, 96
        %v1454 = vpop.permute.xlu0 %1453
        %1455 = vrot.lane.b32.xlu0 %v713, 96
        %v1456 = vpop.permute.xlu0 %1455
        %1457 = vrot.lane.b32.xlu0 %v714, 96
        %v1458 = vpop.permute.xlu0 %1457
        %1459 = vrot.lane.b32.xlu0 %v715, 96
        %v1460 = vpop.permute.xlu0 %1459
        %1461 = vrot.lane.b32.xlu0 %v716, 96
        %v1462 = vpop.permute.xlu0 %1461
        %1463 = vrot.lane.b32.xlu0 %v717, 96
        %v1464 = vpop.permute.xlu0 %1463
        %1465 = vrot.lane.b32.xlu0 %v718, 96
        %v1466 = vpop.permute.xlu0 %1465
        %1467 = vrot.lane.b32.xlu0 %v719, 96
        %v1468 = vpop.permute.xlu0 %1467
        %1469 = vrot.lane.b32.xlu0 %v720, 96
        %v1470 = vpop.permute.xlu0 %1469
        %1471 = vrot.lane.b32.xlu0 %v721, 96
        %v1472 = vpop.permute.xlu0 %1471
        %1473 = vrot.lane.b32.xlu0 %v722, 96
        %v1474 = vpop.permute.xlu0 %1473
        %1475 = vrot.lane.b32.xlu0 %v723, 96
        %v1476 = vpop.permute.xlu0 %1475
        %1477 = vrot.lane.b32.xlu0 %v724, 96
        %v1478 = vpop.permute.xlu0 %1477
        %1479 = vrot.lane.b32.xlu0 %v725, 96
        %v1480 = vpop.permute.xlu0 %1479
        %1481 = vrot.lane.b32.xlu0 %v726, 96
        %v1482 = vpop.permute.xlu0 %1481
        %1483 = vrot.lane.b32.xlu0 %v727, 96
        %v1484 = vpop.permute.xlu0 %1483
        %1485 = vrot.lane.b32.xlu0 %v728, 96
        %v1486 = vpop.permute.xlu0 %1485
        %1487 = vrot.lane.b32.xlu0 %v729, 96
        %v1488 = vpop.permute.xlu0 %1487
        %1489 = vrot.lane.b32.xlu0 %v730, 96
        %v1490 = vpop.permute.xlu0 %1489
        %1491 = vrot.lane.b32.xlu0 %v731, 96
        %v1492 = vpop.permute.xlu0 %1491
        %1493 = vrot.lane.b32.xlu0 %v732, 96
        %v1494 = vpop.permute.xlu0 %1493
        %1495 = vrot.lane.b32.xlu0 %v733, 96
        %v1496 = vpop.permute.xlu0 %1495
        %1497 = vrot.lane.b32.xlu0 %v734, 96
        %v1498 = vpop.permute.xlu0 %1497
        %1499 = vrot.lane.b32.xlu0 %v735, 96
        %v1500 = vpop.permute.xlu0 %1499
        %1501 = vrot.lane.b32.xlu0 %v736, 96
        %v1502 = vpop.permute.xlu0 %1501
        %1503 = vrot.lane.b32.xlu0 %v737, 96
        %v1504 = vpop.permute.xlu0 %1503
        %1505 = vrot.lane.b32.xlu0 %v738, 96
        %v1506 = vpop.permute.xlu0 %1505
        %v1539 = vsel %vm393, %v482, %v804
        %v1540 = vsel %vm393, %v483, %v806
        %v1541 = vsel %vm393, %v484, %v808
        %v1542 = vsel %vm393, %v485, %v810
        %v1543 = vsel %vm393, %v486, %v812
        %v1544 = vsel %vm393, %v487, %v814
        %v1545 = vsel %vm393, %v488, %v816
        %v1546 = vsel %vm393, %v489, %v818
        %v1547 = vsel %vm393, %v490, %v820
        %v1548 = vsel %vm393, %v491, %v822
        %v1549 = vsel %vm393, %v492, %v824
        %v1550 = vsel %vm393, %v493, %v826
        %v1551 = vsel %vm393, %v494, %v828
        %v1552 = vsel %vm393, %v495, %v830
        %v1553 = vsel %vm393, %v496, %v832
        %v1554 = vsel %vm393, %v497, %v834
        %v1555 = vsel %vm393, %v498, %v836
        %v1556 = vsel %vm393, %v499, %v838
        %v1557 = vsel %vm393, %v500, %v840
        %v1558 = vsel %vm393, %v501, %v842
        %v1559 = vsel %vm393, %v502, %v844
        %v1560 = vsel %vm393, %v503, %v846
        %v1561 = vsel %vm393, %v504, %v848
        %v1562 = vsel %vm393, %v505, %v850
        %v1563 = vsel %vm393, %v506, %v852
        %v1564 = vsel %vm393, %v507, %v854
        %v1565 = vsel %vm393, %v508, %v856
        %v1566 = vsel %vm393, %v509, %v858
        %v1567 = vsel %vm393, %v510, %v860
        %v1568 = vsel %vm393, %v511, %v862
        %v1569 = vsel %vm393, %v512, %v864
        %v1570 = vsel %vm393, %v513, %v866
        %vm1571 = vcmask 523264
        %v1572 = vsel %vm1571, %v1539, %v932
        %v1573 = vsel %vm1571, %v1540, %v934
        %v1574 = vsel %vm1571, %v1541, %v936
        %v1575 = vsel %vm1571, %v1542, %v938
        %v1576 = vsel %vm1571, %v1543, %v940
        %v1577 = vsel %vm1571, %v1544, %v942
        %v1578 = vsel %vm1571, %v1545, %v944
        %v1579 = vsel %vm1571, %v1546, %v946
        %v1580 = vsel %vm1571, %v1547, %v948
        %v1581 = vsel %vm1571, %v1548, %v950
        %v1582 = vsel %vm1571, %v1549, %v952
        %v1583 = vsel %vm1571, %v1550, %v954
        %v1584 = vsel %vm1571, %v1551, %v956
        %v1585 = vsel %vm1571, %v1552, %v958
        %v1586 = vsel %vm1571, %v1553, %v960
        %v1587 = vsel %vm1571, %v1554, %v962
        %v1588 = vsel %vm1571, %v1555, %v964
        %v1589 = vsel %vm1571, %v1556, %v966
        %v1590 = vsel %vm1571, %v1557, %v968
        %v1591 = vsel %vm1571, %v1558, %v970
        %v1592 = vsel %vm1571, %v1559, %v972
        %v1593 = vsel %vm1571, %v1560, %v974
        %v1594 = vsel %vm1571, %v1561, %v976
        %v1595 = vsel %vm1571, %v1562, %v978
        %v1596 = vsel %vm1571, %v1563, %v980
        %v1597 = vsel %vm1571, %v1564, %v982
        %v1598 = vsel %vm1571, %v1565, %v984
        %v1599 = vsel %vm1571, %v1566, %v986
        %v1600 = vsel %vm1571, %v1567, %v988
        %v1601 = vsel %vm1571, %v1568, %v990
        %v1602 = vsel %vm1571, %v1569, %v992
        %v1603 = vsel %vm1571, %v1570, %v994
        %vm1604 = vcmask 785408
        %v1605 = vsel %vm1604, %v1572, %v1060
        %v1606 = vsel %vm1604, %v1573, %v1062
        %v1607 = vsel %vm1604, %v1574, %v1064
        %v1608 = vsel %vm1604, %v1575, %v1066
        %v1609 = vsel %vm1604, %v1576, %v1068
        %v1610 = vsel %vm1604, %v1577, %v1070
        %v1611 = vsel %vm1604, %v1578, %v1072
        %v1612 = vsel %vm1604, %v1579, %v1074
        %v1613 = vsel %vm1604, %v1580, %v1076
        %v1614 = vsel %vm1604, %v1581, %v1078
        %v1615 = vsel %vm1604, %v1582, %v1080
        %v1616 = vsel %vm1604, %v1583, %v1082
        %v1617 = vsel %vm1604, %v1584, %v1084
        %v1618 = vsel %vm1604, %v1585, %v1086
        %v1619 = vsel %vm1604, %v1586, %v1088
        %v1620 = vsel %vm1604, %v1587, %v1090
        %v1621 = vsel %vm1604, %v1588, %v1092
        %v1622 = vsel %vm1604, %v1589, %v1094
        %v1623 = vsel %vm1604, %v1590, %v1096
        %v1624 = vsel %vm1604, %v1591, %v1098
        %v1625 = vsel %vm1604, %v1592, %v1100
        %v1626 = vsel %vm1604, %v1593, %v1102
        %v1627 = vsel %vm1604, %v1594, %v1104
        %v1628 = vsel %vm1604, %v1595, %v1106
        %v1629 = vsel %vm1604, %v1596, %v1108
        %v1630 = vsel %vm1604, %v1597, %v1110
        %v1631 = vsel %vm1604, %v1598, %v1112
        %v1632 = vsel %vm1604, %v1599, %v1114
        %v1633 = vsel %vm1604, %v1600, %v1116
        %v1634 = vsel %vm1604, %v1601, %v1118
        %v1635 = vsel %vm1604, %v1602, %v1120
        %v1636 = vsel %vm1604, %v1603, %v1122
        %v1637 = vsel %vm393, %v610, %v1188
        %v1638 = vsel %vm393, %v611, %v1190
        %v1639 = vsel %vm393, %v612, %v1192
        %v1640 = vsel %vm393, %v613, %v1194
        %v1641 = vsel %vm393, %v614, %v1196
        %v1642 = vsel %vm393, %v615, %v1198
        %v1643 = vsel %vm393, %v616, %v1200
        %v1644 = vsel %vm393, %v617, %v1202
        %v1645 = vsel %vm393, %v618, %v1204
        %v1646 = vsel %vm393, %v619, %v1206
        %v1647 = vsel %vm393, %v620, %v1208
        %v1648 = vsel %vm393, %v621, %v1210
        %v1649 = vsel %vm393, %v622, %v1212
        %v1650 = vsel %vm393, %v623, %v1214
        %v1651 = vsel %vm393, %v624, %v1216
        %v1652 = vsel %vm393, %v625, %v1218
        %v1653 = vsel %vm393, %v626, %v1220
        %v1654 = vsel %vm393, %v627, %v1222
        %v1655 = vsel %vm393, %v628, %v1224
        %v1656 = vsel %vm393, %v629, %v1226
        %v1657 = vsel %vm393, %v630, %v1228
        %v1658 = vsel %vm393, %v631, %v1230
        %v1659 = vsel %vm393, %v632, %v1232
        %v1660 = vsel %vm393, %v633, %v1234
        %v1661 = vsel %vm393, %v634, %v1236
        %v1662 = vsel %vm393, %v635, %v1238
        %v1663 = vsel %vm393, %v636, %v1240
        %v1664 = vsel %vm393, %v637, %v1242
        %v1665 = vsel %vm393, %v638, %v1244
        %v1666 = vsel %vm393, %v639, %v1246
        %v1667 = vsel %vm393, %v640, %v1248
        %v1668 = vsel %vm393, %v641, %v1250
        %v1669 = vsel %vm1571, %v1637, %v1316
        %v1670 = vsel %vm1571, %v1638, %v1318
        %v1671 = vsel %vm1571, %v1639, %v1320
        %v1672 = vsel %vm1571, %v1640, %v1322
        %v1673 = vsel %vm1571, %v1641, %v1324
        %v1674 = vsel %vm1571, %v1642, %v1326
        %v1675 = vsel %vm1571, %v1643, %v1328
        %v1676 = vsel %vm1571, %v1644, %v1330
        %v1677 = vsel %vm1571, %v1645, %v1332
        %v1678 = vsel %vm1571, %v1646, %v1334
        %v1679 = vsel %vm1571, %v1647, %v1336
        %v1680 = vsel %vm1571, %v1648, %v1338
        %v1681 = vsel %vm1571, %v1649, %v1340
        %v1682 = vsel %vm1571, %v1650, %v1342
        %v1683 = vsel %vm1571, %v1651, %v1344
        %v1684 = vsel %vm1571, %v1652, %v1346
        %v1685 = vsel %vm1571, %v1653, %v1348
        %v1686 = vsel %vm1571, %v1654, %v1350
        %v1687 = vsel %vm1571, %v1655, %v1352
        %v1688 = vsel %vm1571, %v1656, %v1354
        %v1689 = vsel %vm1571, %v1657, %v1356
        %v1690 = vsel %vm1571, %v1658, %v1358
        %v1691 = vsel %vm1571, %v1659, %v1360
        %v1692 = vsel %vm1571, %v1660, %v1362
        %v1693 = vsel %vm1571, %v1661, %v1364
        %v1694 = vsel %vm1571, %v1662, %v1366
        %v1695 = vsel %vm1571, %v1663, %v1368
        %v1696 = vsel %vm1571, %v1664, %v1370
        %v1697 = vsel %vm1571, %v1665, %v1372
        %v1698 = vsel %vm1571, %v1666, %v1374
        %v1699 = vsel %vm1571, %v1667, %v1376
        %v1700 = vsel %vm1571, %v1668, %v1378
        %v1701 = vsel %vm1604, %v1669, %v1444
        %v1702 = vsel %vm1604, %v1670, %v1446
        %v1703 = vsel %vm1604, %v1671, %v1448
        %v1704 = vsel %vm1604, %v1672, %v1450
        %v1705 = vsel %vm1604, %v1673, %v1452
        %v1706 = vsel %vm1604, %v1674, %v1454
        %v1707 = vsel %vm1604, %v1675, %v1456
        %v1708 = vsel %vm1604, %v1676, %v1458
        %v1709 = vsel %vm1604, %v1677, %v1460
        %v1710 = vsel %vm1604, %v1678, %v1462
        %v1711 = vsel %vm1604, %v1679, %v1464
        %v1712 = vsel %vm1604, %v1680, %v1466
        %v1713 = vsel %vm1604, %v1681, %v1468
        %v1714 = vsel %vm1604, %v1682, %v1470
        %v1715 = vsel %vm1604, %v1683, %v1472
        %v1716 = vsel %vm1604, %v1684, %v1474
        %v1717 = vsel %vm1604, %v1685, %v1476
        %v1718 = vsel %vm1604, %v1686, %v1478
        %v1719 = vsel %vm1604, %v1687, %v1480
        %v1720 = vsel %vm1604, %v1688, %v1482
        %v1721 = vsel %vm1604, %v1689, %v1484
        %v1722 = vsel %vm1604, %v1690, %v1486
        %v1723 = vsel %vm1604, %v1691, %v1488
        %v1724 = vsel %vm1604, %v1692, %v1490
        %v1725 = vsel %vm1604, %v1693, %v1492
        %v1726 = vsel %vm1604, %v1694, %v1494
        %v1727 = vsel %vm1604, %v1695, %v1496
        %v1728 = vsel %vm1604, %v1696, %v1498
        %v1729 = vsel %vm1604, %v1697, %v1500
        %v1730 = vsel %vm1604, %v1698, %v1502
        %v1731 = vsel %vm1604, %v1699, %v1504
        %v1732 = vsel %vm1604, %v1700, %v1506
        %v1733 = vpack.c.bf16 %v1606, %v1605
        %v1734 = vpack.c.bf16 %v1702, %v1701
        %v1735 = vpack.c.bf16 %v740, %v739
        %v1736 = vpack.c.bf16 %v1608, %v1607
        %v1737 = vpack.c.bf16 %v1704, %v1703
        %v1738 = vpack.c.bf16 %v742, %v741
        %v1739 = vpack.c.bf16 %v1610, %v1609
        %v1740 = vpack.c.bf16 %v1706, %v1705
        %v1741 = vpack.c.bf16 %v744, %v743
        %v1742 = vpack.c.bf16 %v1612, %v1611
        %v1743 = vpack.c.bf16 %v1708, %v1707
        %v1744 = vpack.c.bf16 %v746, %v745
        %v1745 = vpack.c.bf16 %v1614, %v1613
        %v1746 = vpack.c.bf16 %v1710, %v1709
        %v1747 = vpack.c.bf16 %v748, %v747
        %v1748 = vpack.c.bf16 %v1616, %v1615
        %v1749 = vpack.c.bf16 %v1712, %v1711
        %v1750 = vpack.c.bf16 %v750, %v749
        %v1751 = vpack.c.bf16 %v1618, %v1617
        %v1752 = vpack.c.bf16 %v1714, %v1713
        %v1753 = vpack.c.bf16 %v752, %v751
        %v1754 = vpack.c.bf16 %v1620, %v1619
        %v1755 = vpack.c.bf16 %v1716, %v1715
        %v1756 = vpack.c.bf16 %v754, %v753
        %v1757 = vpack.c.bf16 %v1622, %v1621
        %v1758 = vpack.c.bf16 %v1718, %v1717
        %v1759 = vpack.c.bf16 %v756, %v755
        %v1760 = vpack.c.bf16 %v1624, %v1623
        %v1761 = vpack.c.bf16 %v1720, %v1719
        %v1762 = vpack.c.bf16 %v758, %v757
        %v1763 = vpack.c.bf16 %v1626, %v1625
        %v1764 = vpack.c.bf16 %v1722, %v1721
        %v1765 = vpack.c.bf16 %v760, %v759
        %v1766 = vpack.c.bf16 %v1628, %v1627
        %v1767 = vpack.c.bf16 %v1724, %v1723
        %v1768 = vpack.c.bf16 %v762, %v761
        %v1769 = vpack.c.bf16 %v1630, %v1629
        %v1770 = vpack.c.bf16 %v1726, %v1725
        %v1771 = vpack.c.bf16 %v764, %v763
        %v1772 = vpack.c.bf16 %v1632, %v1631
        %v1773 = vpack.c.bf16 %v1728, %v1727
        %v1774 = vpack.c.bf16 %v766, %v765
        %v1775 = vpack.c.bf16 %v1634, %v1633
        %v1776 = vpack.c.bf16 %v1730, %v1729
        %v1777 = vpack.c.bf16 %v768, %v767
        %v1778 = vpack.c.bf16 %v1636, %v1635
        %v1779 = vpack.c.bf16 %v1732, %v1731
        %v1780 = vpack.c.bf16 %v770, %v769
        %v1781 = vld [vmem:[%s3] sm:$0xf]
        %v1782 = vld [vmem:[%s3 + $0x4] sm:$0xf]
        %v1783 = vld [vmem:[%s3 + $0x8] sm:$0xf]
        %v1784 = vld [vmem:[%s3 + $0xc] sm:$0xf]
        %v1785 = vld [vmem:[%s3 + $0x10] sm:$0xf]
        %v1786 = vld [vmem:[%s3 + $0x14] sm:$0xf]
        %v1787 = vld [vmem:[%s3 + $0x18] sm:$0xf]
        %v1788 = vld [vmem:[%s3 + $0x1c] sm:$0xf]
        %v1789 = vld [vmem:[%s3 + $0x20] sm:$0xf]
        %v1790 = vld [vmem:[%s3 + $0x24] sm:$0xf]
        %v1791 = vld [vmem:[%s3 + $0x28] sm:$0xf]
        %v1792 = vld [vmem:[%s3 + $0x2c] sm:$0xf]
        %v1793 = vld [vmem:[%s3 + $0x30] sm:$0xf]
        %v1794 = vld [vmem:[%s3 + $0x34] sm:$0xf]
        %v1795 = vld [vmem:[%s3 + $0x38] sm:$0xf]
        %v1796 = vld [vmem:[%s3 + $0x3c] sm:$0xf]
        %v1797 = vld [vmem:[%s3 + $0x40] sm:$0xf]
        %v1798 = vld [vmem:[%s3 + $0x44] sm:$0xf]
        %v1799 = vld [vmem:[%s3 + $0x48] sm:$0xf]
        %v1800 = vld [vmem:[%s3 + $0x4c] sm:$0xf]
        %v1801 = vld [vmem:[%s3 + $0x50] sm:$0xf]
        %v1802 = vld [vmem:[%s3 + $0x54] sm:$0xf]
        %v1803 = vld [vmem:[%s3 + $0x58] sm:$0xf]
        %v1804 = vld [vmem:[%s3 + $0x5c] sm:$0xf]
        %v1805 = vld [vmem:[%s3 + $0x60] sm:$0xf]
        %v1806 = vld [vmem:[%s3 + $0x64] sm:$0xf]
        %v1807 = vld [vmem:[%s3 + $0x68] sm:$0xf]
        %v1808 = vld [vmem:[%s3 + $0x6c] sm:$0xf]
        %v1809 = vld [vmem:[%s3 + $0x70] sm:$0xf]
        %v1810 = vld [vmem:[%s3 + $0x74] sm:$0xf]
        %v1811 = vld [vmem:[%s3 + $0x78] sm:$0xf]
        %v1812 = vld [vmem:[%s3 + $0x7c] sm:$0xf]
        %v1813 = vld [vmem:[%s3 + $0x80] sm:$0xf]
        %v1814 = vld [vmem:[%s3 + $0x84] sm:$0xf]
        %v1815 = vld [vmem:[%s3 + $0x88] sm:$0xf]
        %v1816 = vld [vmem:[%s3 + $0x8c] sm:$0xf]
        %v1853 = vunpack.c.l.b16 %v1781
        %v1854 = vunpack.c.l.b16 %v1782
        %v1855 = vunpack.c.l.b16 %v1783
        %v1856 = vunpack.c.l.b16 %v1784
        %v1857 = vunpack.c.l.b16 %v1785
        %v1858 = vunpack.c.l.b16 %v1786
        %v1859 = vunpack.c.l.b16 %v1787
        %v1860 = vunpack.c.l.b16 %v1788
        %v1861 = vunpack.c.l.b16 %v1789
        %v1862 = vunpack.c.l.b16 %v1790
        %v1863 = vunpack.c.l.b16 %v1791
        %v1864 = vunpack.c.l.b16 %v1792
        %v1865 = vunpack.c.l.b16 %v1793
        %v1866 = vunpack.c.l.b16 %v1794
        %v1867 = vunpack.c.l.b16 %v1795
        %v1868 = vunpack.c.l.b16 %v1796
        %v1869 = vunpack.c.l.b16 %v1797
        %v1870 = vunpack.c.l.b16 %v1798
        %v1871 = vunpack.c.l.b16 %v1799
        %v1872 = vunpack.c.l.b16 %v1800
        %v1873 = vunpack.c.l.b16 %v1801
        %v1874 = vunpack.c.l.b16 %v1802
        %v1875 = vunpack.c.l.b16 %v1803
        %v1876 = vunpack.c.l.b16 %v1804
        %v1877 = vunpack.c.l.b16 %v1805
        %v1878 = vunpack.c.l.b16 %v1806
        %v1879 = vunpack.c.l.b16 %v1807
        %v1880 = vunpack.c.l.b16 %v1808
        %v1881 = vunpack.c.l.b16 %v1809
        %v1882 = vunpack.c.l.b16 %v1810
        %v1883 = vunpack.c.l.b16 %v1811
        %v1884 = vunpack.c.l.b16 %v1812
        %v1885 = vunpack.c.l.b16 %v1813
        %v1886 = vunpack.c.l.b16 %v1814
        %v1887 = vunpack.c.l.b16 %v1815
        %v1888 = vunpack.c.l.b16 %v1816
        %v1889 = vpack.c.b16 %v1854, %v1853
        %v1890 = vpack.c.b16 %v1856, %v1855
        %v1891 = vpack.c.b16 %v1858, %v1857
        %v1892 = vpack.c.b16 %v1860, %v1859
        %v1893 = vpack.c.b16 %v1862, %v1861
        %v1894 = vpack.c.b16 %v1864, %v1863
        %v1895 = vpack.c.b16 %v1866, %v1865
        %v1896 = vpack.c.b16 %v1868, %v1867
        %v1897 = vpack.c.b16 %v1870, %v1869
        %v1898 = vpack.c.b16 %v1872, %v1871
        %v1899 = vpack.c.b16 %v1874, %v1873
        %v1900 = vpack.c.b16 %v1876, %v1875
        %v1901 = vpack.c.b16 %v1878, %v1877
        %v1902 = vpack.c.b16 %v1880, %v1879
        %v1903 = vpack.c.b16 %v1882, %v1881
        %v1904 = vpack.c.b16 %v1884, %v1883
        %v1905 = vpack.c.b16 %v1886, %v1885
        %v1906 = vpack.c.b16 %v1888, %v1887
        %v1926 = vsel %vm393, %v1735, 0
        %v1929 = vsel %vm393, %v1738, 0
        %v1932 = vsel %vm393, %v1741, 0
        %v1935 = vsel %vm393, %v1744, 0
        %v1938 = vsel %vm393, %v1747, 0
        %v1941 = vsel %vm393, %v1750, 0
        %v1944 = vsel %vm393, %v1753, 0
        %v1947 = vsel %vm393, %v1756, 0
        %v1950 = vsel %vm393, %v1759, 0
        %v1953 = vsel %vm393, %v1762, 0
        %v1956 = vsel %vm393, %v1765, 0
        %v1959 = vsel %vm393, %v1768, 0
        %v1962 = vsel %vm393, %v1771, 0
        %v1965 = vsel %vm393, %v1774, 0
        %v1968 = vsel %vm393, %v1777, 0
        %v1971 = vsel %vm393, %v1780, 0
        %1973 = vmatpush.bf16.msra.mxu0 %v1896
        %1974 = vmatpush.bf16.msra.mxu0 %v1895
        %1975 = vmatpush.bf16.msra.mxu0 %v1894
        %1976 = vmatpush.bf16.msra.mxu0 %v1893
        %1977 = vmatpush.bf16.msra.mxu0 %v1892
        %1978 = vmatpush.bf16.msra.mxu0 %v1891
        %1979 = vmatpush.bf16.msra.mxu0 %v1890
        %1980 = vmatpush.bf16.msra.mxu0 %v1889
        %1981 = vmatmul.bf16.gmra.mxu0 %v1733
        %v1982 = vpop.f32.mrf.mxu0
        %v1983 = vadd.f32 0.0, %v1982
        %v1984 = vpop.f32.mrf.mxu0
        %v1985 = vadd.f32 0.0, %v1984
        %1986 = vmatmul.bf16.gmra.mxu0 %v1736
        %v1987 = vpop.f32.mrf.mxu0
        %v1988 = vadd.f32 0.0, %v1987
        %v1989 = vpop.f32.mrf.mxu0
        %v1990 = vadd.f32 0.0, %v1989
        %1991 = vmatmul.bf16.gmra.mxu0 %v1739
        %v1992 = vpop.f32.mrf.mxu0
        %v1993 = vadd.f32 0.0, %v1992
        %v1994 = vpop.f32.mrf.mxu0
        %v1995 = vadd.f32 0.0, %v1994
        %1996 = vmatmul.bf16.gmra.mxu0 %v1742
        %v1997 = vpop.f32.mrf.mxu0
        %v1998 = vadd.f32 0.0, %v1997
        %v1999 = vpop.f32.mrf.mxu0
        %v2000 = vadd.f32 0.0, %v1999
        %2001 = vmatmul.bf16.gmra.mxu0 %v1745
        %v2002 = vpop.f32.mrf.mxu0
        %v2003 = vadd.f32 0.0, %v2002
        %v2004 = vpop.f32.mrf.mxu0
        %v2005 = vadd.f32 0.0, %v2004
        %2006 = vmatmul.bf16.gmra.mxu0 %v1748
        %v2007 = vpop.f32.mrf.mxu0
        %v2008 = vadd.f32 0.0, %v2007
        %v2009 = vpop.f32.mrf.mxu0
        %v2010 = vadd.f32 0.0, %v2009
        %2011 = vmatmul.bf16.gmra.mxu0 %v1751
        %v2012 = vpop.f32.mrf.mxu0
        %v2013 = vadd.f32 0.0, %v2012
        %v2014 = vpop.f32.mrf.mxu0
        %v2015 = vadd.f32 0.0, %v2014
        %2016 = vmatmul.bf16.gmra.mxu0 %v1754
        %v2017 = vpop.f32.mrf.mxu0
        %v2018 = vadd.f32 0.0, %v2017
        %v2019 = vpop.f32.mrf.mxu0
        %v2020 = vadd.f32 0.0, %v2019
        %2021 = vmatmul.bf16.gmra.mxu0 %v1757
        %v2022 = vpop.f32.mrf.mxu0
        %v2023 = vadd.f32 0.0, %v2022
        %v2024 = vpop.f32.mrf.mxu0
        %v2025 = vadd.f32 0.0, %v2024
        %2026 = vmatmul.bf16.gmra.mxu0 %v1760
        %v2027 = vpop.f32.mrf.mxu0
        %v2028 = vadd.f32 0.0, %v2027
        %v2029 = vpop.f32.mrf.mxu0
        %v2030 = vadd.f32 0.0, %v2029
        %2031 = vmatmul.bf16.gmra.mxu0 %v1763
        %v2032 = vpop.f32.mrf.mxu0
        %v2033 = vadd.f32 0.0, %v2032
        %v2034 = vpop.f32.mrf.mxu0
        %v2035 = vadd.f32 0.0, %v2034
        %2036 = vmatmul.bf16.gmra.mxu0 %v1766
        %v2037 = vpop.f32.mrf.mxu0
        %v2038 = vadd.f32 0.0, %v2037
        %v2039 = vpop.f32.mrf.mxu0
        %v2040 = vadd.f32 0.0, %v2039
        %2041 = vmatmul.bf16.gmra.mxu0 %v1769
        %v2042 = vpop.f32.mrf.mxu0
        %v2043 = vadd.f32 0.0, %v2042
        %v2044 = vpop.f32.mrf.mxu0
        %v2045 = vadd.f32 0.0, %v2044
        %2046 = vmatmul.bf16.gmra.mxu0 %v1772
        %v2047 = vpop.f32.mrf.mxu0
        %v2048 = vadd.f32 0.0, %v2047
        %v2049 = vpop.f32.mrf.mxu0
        %v2050 = vadd.f32 0.0, %v2049
        %2051 = vmatmul.bf16.gmra.mxu0 %v1775
        %v2052 = vpop.f32.mrf.mxu0
        %v2053 = vadd.f32 0.0, %v2052
        %v2054 = vpop.f32.mrf.mxu0
        %v2055 = vadd.f32 0.0, %v2054
        %2056 = vmatmul.bf16.gmra.mxu0 %v1778
        %v2057 = vpop.f32.mrf.mxu0
        %v2058 = vadd.f32 0.0, %v2057
        %v2059 = vpop.f32.mrf.mxu0
        %v2060 = vadd.f32 0.0, %v2059
        %2061 = vdwg.mxu0
        %2062 = vmatpush.bf16.msra.mxu0 %v1904
        %2063 = vmatpush.bf16.msra.mxu0 %v1903
        %2064 = vmatpush.bf16.msra.mxu0 %v1902
        %2065 = vmatpush.bf16.msra.mxu0 %v1901
        %2066 = vmatpush.bf16.msra.mxu0 %v1900
        %2067 = vmatpush.bf16.msra.mxu0 %v1899
        %2068 = vmatpush.bf16.msra.mxu0 %v1898
        %2069 = vmatpush.bf16.msra.mxu0 %v1897
        %2070 = vmatmul.bf16.gmra.mxu0 %v1734
        %v2071 = vpop.f32.mrf.mxu0
        %v2072 = vadd.f32 %v1983, %v2071
        %v2073 = vpop.f32.mrf.mxu0
        %v2074 = vadd.f32 %v1985, %v2073
        %2075 = vmatmul.bf16.gmra.mxu0 %v1737
        %v2076 = vpop.f32.mrf.mxu0
        %v2077 = vadd.f32 %v1988, %v2076
        %v2078 = vpop.f32.mrf.mxu0
        %v2079 = vadd.f32 %v1990, %v2078
        %2080 = vmatmul.bf16.gmra.mxu0 %v1740
        %v2081 = vpop.f32.mrf.mxu0
        %v2082 = vadd.f32 %v1993, %v2081
        %v2083 = vpop.f32.mrf.mxu0
        %v2084 = vadd.f32 %v1995, %v2083
        %2085 = vmatmul.bf16.gmra.mxu0 %v1743
        %v2086 = vpop.f32.mrf.mxu0
        %v2087 = vadd.f32 %v1998, %v2086
        %v2088 = vpop.f32.mrf.mxu0
        %v2089 = vadd.f32 %v2000, %v2088
        %2090 = vmatmul.bf16.gmra.mxu0 %v1746
        %v2091 = vpop.f32.mrf.mxu0
        %v2092 = vadd.f32 %v2003, %v2091
        %v2093 = vpop.f32.mrf.mxu0
        %v2094 = vadd.f32 %v2005, %v2093
        %2095 = vmatmul.bf16.gmra.mxu0 %v1749
        %v2096 = vpop.f32.mrf.mxu0
        %v2097 = vadd.f32 %v2008, %v2096
        %v2098 = vpop.f32.mrf.mxu0
        %v2099 = vadd.f32 %v2010, %v2098
        %2100 = vmatmul.bf16.gmra.mxu0 %v1752
        %v2101 = vpop.f32.mrf.mxu0
        %v2102 = vadd.f32 %v2013, %v2101
        %v2103 = vpop.f32.mrf.mxu0
        %v2104 = vadd.f32 %v2015, %v2103
        %2105 = vmatmul.bf16.gmra.mxu0 %v1755
        %v2106 = vpop.f32.mrf.mxu0
        %v2107 = vadd.f32 %v2018, %v2106
        %v2108 = vpop.f32.mrf.mxu0
        %v2109 = vadd.f32 %v2020, %v2108
        %2110 = vmatmul.bf16.gmra.mxu0 %v1758
        %v2111 = vpop.f32.mrf.mxu0
        %v2112 = vadd.f32 %v2023, %v2111
        %v2113 = vpop.f32.mrf.mxu0
        %v2114 = vadd.f32 %v2025, %v2113
        %2115 = vmatmul.bf16.gmra.mxu0 %v1761
        %v2116 = vpop.f32.mrf.mxu0
        %v2117 = vadd.f32 %v2028, %v2116
        %v2118 = vpop.f32.mrf.mxu0
        %v2119 = vadd.f32 %v2030, %v2118
        %2120 = vmatmul.bf16.gmra.mxu0 %v1764
        %v2121 = vpop.f32.mrf.mxu0
        %v2122 = vadd.f32 %v2033, %v2121
        %v2123 = vpop.f32.mrf.mxu0
        %v2124 = vadd.f32 %v2035, %v2123
        %2125 = vmatmul.bf16.gmra.mxu0 %v1767
        %v2126 = vpop.f32.mrf.mxu0
        %v2127 = vadd.f32 %v2038, %v2126
        %v2128 = vpop.f32.mrf.mxu0
        %v2129 = vadd.f32 %v2040, %v2128
        %2130 = vmatmul.bf16.gmra.mxu0 %v1770
        %v2131 = vpop.f32.mrf.mxu0
        %v2132 = vadd.f32 %v2043, %v2131
        %v2133 = vpop.f32.mrf.mxu0
        %v2134 = vadd.f32 %v2045, %v2133
        %2135 = vmatmul.bf16.gmra.mxu0 %v1773
        %v2136 = vpop.f32.mrf.mxu0
        %v2137 = vadd.f32 %v2048, %v2136
        %v2138 = vpop.f32.mrf.mxu0
        %v2139 = vadd.f32 %v2050, %v2138
        %2140 = vmatmul.bf16.gmra.mxu0 %v1776
        %v2141 = vpop.f32.mrf.mxu0
        %v2142 = vadd.f32 %v2053, %v2141
        %v2143 = vpop.f32.mrf.mxu0
        %v2144 = vadd.f32 %v2055, %v2143
        %2145 = vmatmul.bf16.gmra.mxu0 %v1779
        %v2146 = vpop.f32.mrf.mxu0
        %v2147 = vadd.f32 %v2058, %v2146
        %v2148 = vpop.f32.mrf.mxu0
        %v2149 = vadd.f32 %v2060, %v2148
        %2150 = vdwg.mxu0
        %2151 = vmatpush.bf16.msra.mxu0 0
        %2152 = vmatpush.bf16.msra.mxu0 0
        %2153 = vmatpush.bf16.msra.mxu0 0
        %2154 = vmatpush.bf16.msra.mxu0 0
        %2155 = vmatpush.bf16.msra.mxu0 0
        %2156 = vmatpush.bf16.msra.mxu0 0
        %2157 = vmatpush.bf16.msra.mxu0 %v1906
        %2158 = vmatpush.bf16.msra.mxu0 %v1905
        %2159 = vmatmul.bf16.gmra.mxu0 %v1926
        %v2160 = vpop.f32.mrf.mxu0
        %v2161 = vadd.f32 %v2072, %v2160
        %v2162 = vpop.f32.mrf.mxu0
        %v2163 = vadd.f32 %v2074, %v2162
        %2164 = vmatmul.bf16.gmra.mxu0 %v1929
        %v2165 = vpop.f32.mrf.mxu0
        %v2166 = vadd.f32 %v2077, %v2165
        %v2167 = vpop.f32.mrf.mxu0
        %v2168 = vadd.f32 %v2079, %v2167
        %2169 = vmatmul.bf16.gmra.mxu0 %v1932
        %v2170 = vpop.f32.mrf.mxu0
        %v2171 = vadd.f32 %v2082, %v2170
        %v2172 = vpop.f32.mrf.mxu0
        %v2173 = vadd.f32 %v2084, %v2172
        %2174 = vmatmul.bf16.gmra.mxu0 %v1935
        %v2175 = vpop.f32.mrf.mxu0
        %v2176 = vadd.f32 %v2087, %v2175
        %v2177 = vpop.f32.mrf.mxu0
        %v2178 = vadd.f32 %v2089, %v2177
        %2179 = vmatmul.bf16.gmra.mxu0 %v1938
        %v2180 = vpop.f32.mrf.mxu0
        %v2181 = vadd.f32 %v2092, %v2180
        %v2182 = vpop.f32.mrf.mxu0
        %v2183 = vadd.f32 %v2094, %v2182
        %2184 = vmatmul.bf16.gmra.mxu0 %v1941
        %v2185 = vpop.f32.mrf.mxu0
        %v2186 = vadd.f32 %v2097, %v2185
        %v2187 = vpop.f32.mrf.mxu0
        %v2188 = vadd.f32 %v2099, %v2187
        %2189 = vmatmul.bf16.gmra.mxu0 %v1944
        %v2190 = vpop.f32.mrf.mxu0
        %v2191 = vadd.f32 %v2102, %v2190
        %v2192 = vpop.f32.mrf.mxu0
        %v2193 = vadd.f32 %v2104, %v2192
        %2194 = vmatmul.bf16.gmra.mxu0 %v1947
        %v2195 = vpop.f32.mrf.mxu0
        %v2196 = vadd.f32 %v2107, %v2195
        %v2197 = vpop.f32.mrf.mxu0
        %v2198 = vadd.f32 %v2109, %v2197
        %2199 = vmatmul.bf16.gmra.mxu0 %v1950
        %v2200 = vpop.f32.mrf.mxu0
        %v2201 = vadd.f32 %v2112, %v2200
        %v2202 = vpop.f32.mrf.mxu0
        %v2203 = vadd.f32 %v2114, %v2202
        %2204 = vmatmul.bf16.gmra.mxu0 %v1953
        %v2205 = vpop.f32.mrf.mxu0
        %v2206 = vadd.f32 %v2117, %v2205
        %v2207 = vpop.f32.mrf.mxu0
        %v2208 = vadd.f32 %v2119, %v2207
        %2209 = vmatmul.bf16.gmra.mxu0 %v1956
        %v2210 = vpop.f32.mrf.mxu0
        %v2211 = vadd.f32 %v2122, %v2210
        %v2212 = vpop.f32.mrf.mxu0
        %v2213 = vadd.f32 %v2124, %v2212
        %2214 = vmatmul.bf16.gmra.mxu0 %v1959
        %v2215 = vpop.f32.mrf.mxu0
        %v2216 = vadd.f32 %v2127, %v2215
        %v2217 = vpop.f32.mrf.mxu0
        %v2218 = vadd.f32 %v2129, %v2217
        %2219 = vmatmul.bf16.gmra.mxu0 %v1962
        %v2220 = vpop.f32.mrf.mxu0
        %v2221 = vadd.f32 %v2132, %v2220
        %v2222 = vpop.f32.mrf.mxu0
        %v2223 = vadd.f32 %v2134, %v2222
        %2224 = vmatmul.bf16.gmra.mxu0 %v1965
        %v2225 = vpop.f32.mrf.mxu0
        %v2226 = vadd.f32 %v2137, %v2225
        %v2227 = vpop.f32.mrf.mxu0
        %v2228 = vadd.f32 %v2139, %v2227
        %2229 = vmatmul.bf16.gmra.mxu0 %v1968
        %v2230 = vpop.f32.mrf.mxu0
        %v2231 = vadd.f32 %v2142, %v2230
        %v2232 = vpop.f32.mrf.mxu0
        %v2233 = vadd.f32 %v2144, %v2232
        %2234 = vmatmul.bf16.gmra.mxu0 %v1971
        %v2235 = vpop.f32.mrf.mxu0
        %v2236 = vadd.f32 %v2147, %v2235
        %v2237 = vpop.f32.mrf.mxu0
        %v2238 = vadd.f32 %v2149, %v2237
        %2239 = vdwg.mxu0
        %2240 = vst.msk [vmem:[%s275] sm:$0xff] %vm393, %v2161
        %2241 = vst.msk [vmem:[%s275 + $0x8] sm:$0xff] %vm393, %v2163
        %2242 = vst.msk [vmem:[%s275 + $0x10] sm:$0xff] %vm393, %v2166
        %2243 = vst.msk [vmem:[%s275 + $0x18] sm:$0xff] %vm393, %v2168
        %2244 = vst.msk [vmem:[%s275 + $0x20] sm:$0xff] %vm393, %v2171
        %2245 = vst.msk [vmem:[%s275 + $0x28] sm:$0xff] %vm393, %v2173
        %2246 = vst.msk [vmem:[%s275 + $0x30] sm:$0xff] %vm393, %v2176
        %2247 = vst.msk [vmem:[%s275 + $0x38] sm:$0xff] %vm393, %v2178
        %2248 = vst.msk [vmem:[%s275 + $0x40] sm:$0xff] %vm393, %v2181
        %2249 = vst.msk [vmem:[%s275 + $0x48] sm:$0xff] %vm393, %v2183
        %2250 = vst.msk [vmem:[%s275 + $0x50] sm:$0xff] %vm393, %v2186
        %2251 = vst.msk [vmem:[%s275 + $0x58] sm:$0xff] %vm393, %v2188
        %2252 = vst.msk [vmem:[%s275 + $0x60] sm:$0xff] %vm393, %v2191
        %2253 = vst.msk [vmem:[%s275 + $0x68] sm:$0xff] %vm393, %v2193
        %2254 = vst.msk [vmem:[%s275 + $0x70] sm:$0xff] %vm393, %v2196
        %2255 = vst.msk [vmem:[%s275 + $0x78] sm:$0xff] %vm393, %v2198
        %2256 = vst.msk [vmem:[%s275 + $0x80] sm:$0xff] %vm393, %v2201
        %2257 = vst.msk [vmem:[%s275 + $0x88] sm:$0xff] %vm393, %v2203
        %2258 = vst.msk [vmem:[%s275 + $0x90] sm:$0xff] %vm393, %v2206
        %2259 = vst.msk [vmem:[%s275 + $0x98] sm:$0xff] %vm393, %v2208
        %2260 = vst.msk [vmem:[%s275 + $0xa0] sm:$0xff] %vm393, %v2211
        %2261 = vst.msk [vmem:[%s275 + $0xa8] sm:$0xff] %vm393, %v2213
        %2262 = vst.msk [vmem:[%s275 + $0xb0] sm:$0xff] %vm393, %v2216
        %2263 = vst.msk [vmem:[%s275 + $0xb8] sm:$0xff] %vm393, %v2218
        %2264 = vst.msk [vmem:[%s275 + $0xc0] sm:$0xff] %vm393, %v2221
        %2265 = vst.msk [vmem:[%s275 + $0xc8] sm:$0xff] %vm393, %v2223
        %2266 = vst.msk [vmem:[%s275 + $0xd0] sm:$0xff] %vm393, %v2226
        %2267 = vst.msk [vmem:[%s275 + $0xd8] sm:$0xff] %vm393, %v2228
        %2268 = vst.msk [vmem:[%s275 + $0xe0] sm:$0xff] %vm393, %v2231
        %2269 = vst.msk [vmem:[%s275 + $0xe8] sm:$0xff] %vm393, %v2233
        %2270 = vst.msk [vmem:[%s275 + $0xf0] sm:$0xff] %vm393, %v2236
        %2271 = vst.msk [vmem:[%s275 + $0xf8] sm:$0xff] %vm393, %v2238
        %v2272 = vsel %vm393, %v2161, 0.0
        %v2273 = vsel %vm393, %v2163, 0.0
        %v2274 = vadd.f32 %v2272, %v2273
        %v2275 = vsel %vm393, %v2166, 0.0
        %v2276 = vadd.f32 %v2274, %v2275
        %v2277 = vsel %vm393, %v2168, 0.0
        %v2278 = vadd.f32 %v2276, %v2277
        %v2279 = vsel %vm393, %v2171, 0.0
        %v2280 = vadd.f32 %v2278, %v2279
        %v2281 = vsel %vm393, %v2173, 0.0
        %v2282 = vadd.f32 %v2280, %v2281
        %v2283 = vsel %vm393, %v2176, 0.0
        %v2284 = vadd.f32 %v2282, %v2283
        %v2285 = vsel %vm393, %v2178, 0.0
        %v2286 = vadd.f32 %v2284, %v2285
        %v2287 = vsel %vm393, %v2181, 0.0
        %v2288 = vadd.f32 %v2286, %v2287
        %v2289 = vsel %vm393, %v2183, 0.0
        %v2290 = vadd.f32 %v2288, %v2289
        %v2291 = vsel %vm393, %v2186, 0.0
        %v2292 = vadd.f32 %v2290, %v2291
        %v2293 = vsel %vm393, %v2188, 0.0
        %v2294 = vadd.f32 %v2292, %v2293
        %v2295 = vsel %vm393, %v2191, 0.0
        %v2296 = vadd.f32 %v2294, %v2295
        %v2297 = vsel %vm393, %v2193, 0.0
        %v2298 = vadd.f32 %v2296, %v2297
        %v2299 = vsel %vm393, %v2196, 0.0
        %v2300 = vadd.f32 %v2298, %v2299
        %v2301 = vsel %vm393, %v2198, 0.0
        %v2302 = vadd.f32 %v2300, %v2301
        %v2303 = vsel %vm393, %v2201, 0.0
        %v2304 = vadd.f32 %v2302, %v2303
        %v2305 = vsel %vm393, %v2203, 0.0
        %v2306 = vadd.f32 %v2304, %v2305
        %v2307 = vsel %vm393, %v2206, 0.0
        %v2308 = vadd.f32 %v2306, %v2307
        %v2309 = vsel %vm393, %v2208, 0.0
        %v2310 = vadd.f32 %v2308, %v2309
        %v2311 = vsel %vm393, %v2211, 0.0
        %v2312 = vadd.f32 %v2310, %v2311
        %v2313 = vsel %vm393, %v2213, 0.0
        %v2314 = vadd.f32 %v2312, %v2313
        %v2315 = vsel %vm393, %v2216, 0.0
        %v2316 = vadd.f32 %v2314, %v2315
        %v2317 = vsel %vm393, %v2218, 0.0
        %v2318 = vadd.f32 %v2316, %v2317
        %v2319 = vsel %vm393, %v2221, 0.0
        %v2320 = vadd.f32 %v2318, %v2319
        %v2321 = vsel %vm393, %v2223, 0.0
        %v2322 = vadd.f32 %v2320, %v2321
        %v2323 = vsel %vm393, %v2226, 0.0
        %v2324 = vadd.f32 %v2322, %v2323
        %v2325 = vsel %vm393, %v2228, 0.0
        %v2326 = vadd.f32 %v2324, %v2325
        %v2327 = vsel %vm393, %v2231, 0.0
        %v2328 = vadd.f32 %v2326, %v2327
        %v2329 = vsel %vm393, %v2233, 0.0
        %v2330 = vadd.f32 %v2328, %v2329
        %v2331 = vsel %vm393, %v2236, 0.0
        %v2332 = vadd.f32 %v2330, %v2331
        %v2333 = vsel %vm393, %v2238, 0.0
        %v2334 = vadd.f32 %v2332, %v2333
        %v2335 = vrot.slane %v2334, 4
        %v2336 = vadd.f32 %v2334, %v2335
        %v2337 = vrot.slane %v2336, 2
        %v2338 = vadd.f32 %v2336, %v2337
        %v2339 = vrot.slane %v2338, 1
        %v2340 = vadd.f32 %v2338, %v2339
        %vm2341 = vcmask 253952
        %2342 = vst.msk [vmem:[%s281] sm:$0x1] %vm2341, %v2340
        %v2343 = vmul.f32 %v2161, %v2161
        %v2344 = vmul.f32 %v2163, %v2163
        %v2345 = vmul.f32 %v2166, %v2166
        %v2346 = vmul.f32 %v2168, %v2168
        %v2347 = vmul.f32 %v2171, %v2171
        %v2348 = vmul.f32 %v2173, %v2173
        %v2349 = vmul.f32 %v2176, %v2176
        %v2350 = vmul.f32 %v2178, %v2178
        %v2351 = vmul.f32 %v2181, %v2181
        %v2352 = vmul.f32 %v2183, %v2183
        %v2353 = vmul.f32 %v2186, %v2186
        %v2354 = vmul.f32 %v2188, %v2188
        %v2355 = vmul.f32 %v2191, %v2191
        %v2356 = vmul.f32 %v2193, %v2193
        %v2357 = vmul.f32 %v2196, %v2196
        %v2358 = vmul.f32 %v2198, %v2198
        %v2359 = vmul.f32 %v2201, %v2201
        %v2360 = vmul.f32 %v2203, %v2203
        %v2361 = vmul.f32 %v2206, %v2206
        %v2362 = vmul.f32 %v2208, %v2208
        %v2363 = vmul.f32 %v2211, %v2211
        %v2364 = vmul.f32 %v2213, %v2213
        %v2365 = vmul.f32 %v2216, %v2216
        %v2366 = vmul.f32 %v2218, %v2218
        %v2367 = vmul.f32 %v2221, %v2221
        %v2368 = vmul.f32 %v2223, %v2223
        %v2369 = vmul.f32 %v2226, %v2226
        %v2370 = vmul.f32 %v2228, %v2228
        %v2371 = vmul.f32 %v2231, %v2231
        %v2372 = vmul.f32 %v2233, %v2233
        %v2373 = vmul.f32 %v2236, %v2236
        %v2374 = vmul.f32 %v2238, %v2238
        %v2375 = vsel %vm393, %v2343, 0.0
        %v2376 = vsel %vm393, %v2344, 0.0
        %v2377 = vadd.f32 %v2375, %v2376
        %v2378 = vsel %vm393, %v2345, 0.0
        %v2379 = vadd.f32 %v2377, %v2378
        %v2380 = vsel %vm393, %v2346, 0.0
        %v2381 = vadd.f32 %v2379, %v2380
        %v2382 = vsel %vm393, %v2347, 0.0
        %v2383 = vadd.f32 %v2381, %v2382
        %v2384 = vsel %vm393, %v2348, 0.0
        %v2385 = vadd.f32 %v2383, %v2384
        %v2386 = vsel %vm393, %v2349, 0.0
        %v2387 = vadd.f32 %v2385, %v2386
        %v2388 = vsel %vm393, %v2350, 0.0
        %v2389 = vadd.f32 %v2387, %v2388
        %v2390 = vsel %vm393, %v2351, 0.0
        %v2391 = vadd.f32 %v2389, %v2390
        %v2392 = vsel %vm393, %v2352, 0.0
        %v2393 = vadd.f32 %v2391, %v2392
        %v2394 = vsel %vm393, %v2353, 0.0
        %v2395 = vadd.f32 %v2393, %v2394
        %v2396 = vsel %vm393, %v2354, 0.0
        %v2397 = vadd.f32 %v2395, %v2396
        %v2398 = vsel %vm393, %v2355, 0.0
        %v2399 = vadd.f32 %v2397, %v2398
        %v2400 = vsel %vm393, %v2356, 0.0
        %v2401 = vadd.f32 %v2399, %v2400
        %v2402 = vsel %vm393, %v2357, 0.0
        %v2403 = vadd.f32 %v2401, %v2402
        %v2404 = vsel %vm393, %v2358, 0.0
        %v2405 = vadd.f32 %v2403, %v2404
        %v2406 = vsel %vm393, %v2359, 0.0
        %v2407 = vadd.f32 %v2405, %v2406
        %v2408 = vsel %vm393, %v2360, 0.0
        %v2409 = vadd.f32 %v2407, %v2408
        %v2410 = vsel %vm393, %v2361, 0.0
        %v2411 = vadd.f32 %v2409, %v2410
        %v2412 = vsel %vm393, %v2362, 0.0
        %v2413 = vadd.f32 %v2411, %v2412
        %v2414 = vsel %vm393, %v2363, 0.0
        %v2415 = vadd.f32 %v2413, %v2414
        %v2416 = vsel %vm393, %v2364, 0.0
        %v2417 = vadd.f32 %v2415, %v2416
        %v2418 = vsel %vm393, %v2365, 0.0
        %v2419 = vadd.f32 %v2417, %v2418
        %v2420 = vsel %vm393, %v2366, 0.0
        %v2421 = vadd.f32 %v2419, %v2420
        %v2422 = vsel %vm393, %v2367, 0.0
        %v2423 = vadd.f32 %v2421, %v2422
        %v2424 = vsel %vm393, %v2368, 0.0
        %v2425 = vadd.f32 %v2423, %v2424
        %v2426 = vsel %vm393, %v2369, 0.0
        %v2427 = vadd.f32 %v2425, %v2426
        %v2428 = vsel %vm393, %v2370, 0.0
        %v2429 = vadd.f32 %v2427, %v2428
        %v2430 = vsel %vm393, %v2371, 0.0
        %v2431 = vadd.f32 %v2429, %v2430
        %v2432 = vsel %vm393, %v2372, 0.0
        %v2433 = vadd.f32 %v2431, %v2432
        %v2434 = vsel %vm393, %v2373, 0.0
        %v2435 = vadd.f32 %v2433, %v2434
        %v2436 = vsel %vm393, %v2374, 0.0
        %v2437 = vadd.f32 %v2435, %v2436
        %v2438 = vrot.slane %v2437, 4
        %v2439 = vadd.f32 %v2437, %v2438
        %v2440 = vrot.slane %v2439, 2
        %v2441 = vadd.f32 %v2439, %v2440
        %v2442 = vrot.slane %v2441, 1
        %v2443 = vadd.f32 %v2441, %v2442
        %2444 = vst.msk [vmem:[%s287] sm:$0x1] %vm2341, %v2443
        %s2445 = sand.u32 %s124, 1
        %s2446 = scalar_lea.sflag [#allocation5], %s2445
        %s2447 = sand.u32 %s124, 1
        %s2448 = smul.addr %s2447, 256
        %s2449 = scalar_lea.vmem [#allocation6], %s2448
        %s2450 = sand.u32 %s27, 1
        %s2451 = scalar_lea.sflag [#allocation8], %s2450
        %s2452 = sand.u32 %s150, 1
        %s2453 = scalar_lea.vmem [#allocation7], %s2452
        %s2454 = sand.u32 %s27, 1
        %s2455 = scalar_lea.sflag [#allocation8], %s2454
        %s2456 = sand.u32 %s176, 1
        %s2457 = scalar_lea.vmem [#allocation9], %s2456
        // Predicated region
        $region41: #{tpu_custom_call.1} parent=35 // pred_check
          %p2458 = pneg %p134
        $region42: #{tpu_custom_call.1} parent=35 // pred_check_branch
          %2460 = sbr.rel (%p2458) target = $region44
        $region43: #{tpu_custom_call.1} parent=35 // pred_region
          %2462 = vsyncadd %s2446, 0
          %s2463 = smul.addr %s27, 32
          %s2464 = smul.addr %s2463, 8
          %s2465 = scalar_lea.hbm %s4, %s2464
          %s2466 = sshll.u32 %s2449, 4
          %s2467 = int_to_ptr.vmem [resolvable:$true] %s2466
          %s2468 = sshll.u32 %s2465, 4
          %s2469 = int_to_ptr.hbm [resolvable:$true] %s2468
          %2474 = dma.vmem_to_hbm [thread:$0]  %s2467, 4096, %s2469, %s2446, 128, 128, 8
        $region44: #{tpu_custom_call.1} parent=35 // pred_fallthru
          _
        // Predicated region
        $region45: #{tpu_custom_call.1} parent=35 // pred_check
          %p2475 = pneg %p160
        $region46: #{tpu_custom_call.1} parent=35 // pred_check_branch
          %2477 = sbr.rel (%p2475) target = $region48
        $region47: #{tpu_custom_call.1} parent=35 // pred_region
          %2479 = vsyncadd %s2451, 0
          %s2480 = scalar_lea.hbm %s5, %s27
          %s2482 = sshll.u32 %s2453, 4
          %s2483 = int_to_ptr.vmem [resolvable:$true] %s2482
          %s2484 = sshll.u32 %s2480, 4
          %s2485 = int_to_ptr.hbm [resolvable:$true] %s2484
          %2487 = dma.vmem_to_hbm [thread:$0]  %s2483, 16, %s2485, %s2451
        $region48: #{tpu_custom_call.1} parent=35 // pred_fallthru
          _
        // Predicated region
        $region49: #{tpu_custom_call.1} parent=35 // pred_check
          %p2488 = pneg %p186
        $region50: #{tpu_custom_call.1} parent=35 // pred_check_branch
          %2490 = sbr.rel (%p2488) target = $region52
        $region51: #{tpu_custom_call.1} parent=35 // pred_region
          %2492 = vsyncadd %s2455, 0
          %s2493 = scalar_lea.hbm %s6, %s27
          %s2495 = sshll.u32 %s2457, 4
          %s2496 = int_to_ptr.vmem [resolvable:$true] %s2495
          %s2497 = sshll.u32 %s2493, 4
          %s2498 = int_to_ptr.hbm [resolvable:$true] %s2497
          %2500 = dma.vmem_to_hbm [thread:$0]  %s2496, 16, %s2498, %s2455
        $region52: #{tpu_custom_call.1} parent=35 // pred_fallthru
          _
      $region36: #{tpu_custom_call.1} parent=5 // pred_fallthru
        _
      %p2501 = scmp.le.s32.totalorder 2, %s22
      // Predicated region
      $region53: #{tpu_custom_call.1} parent=5 // pred_check
        %p2502 = pneg %p2501
      $region54: #{tpu_custom_call.1} parent=5 // pred_check_branch
        %2504 = sbr.rel (%p2502) target = $region56
      $region55: #{tpu_custom_call.1} parent=5 // pred_region
        %s2505 = ssub.s32 %s22, 2
        // Predicated region
        $region57: #{tpu_custom_call.1} parent=55 // pred_check
          %p2506 = pneg %p140
        $region58: #{tpu_custom_call.1} parent=55 // pred_check_branch
          %2508 = sbr.rel (%p2506) target = $region60
        $region59: #{tpu_custom_call.1} parent=55 // pred_region
          %s2509 = sand.u32 %s125, 1
          %s2510 = scalar_lea.sflag [#allocation5], %s2509
          %s2511 = sand.u32 %s125, 1
          %s2512 = smul.addr %s2511, 256
          %s2513 = scalar_lea.vmem [#allocation6], %s2512
          %2515 = dma.done %s2510, 4096
        $region60: #{tpu_custom_call.1} parent=55 // pred_fallthru
          _
        // Predicated region
        $region61: #{tpu_custom_call.1} parent=55 // pred_check
          %p2516 = pneg %p166
        $region62: #{tpu_custom_call.1} parent=55 // pred_check_branch
          %2518 = sbr.rel (%p2516) target = $region64
        $region63: #{tpu_custom_call.1} parent=55 // pred_region
          %s2519 = sand.u32 %s28, 1
          %s2520 = scalar_lea.sflag [#allocation8], %s2519
          %s2521 = sand.u32 %s151, 1
          %s2522 = scalar_lea.vmem [#allocation7], %s2521
          %2524 = dma.done %s2520, 16
        $region64: #{tpu_custom_call.1} parent=55 // pred_fallthru
          _
        // Predicated region
        $region65: #{tpu_custom_call.1} parent=55 // pred_check
          %p2525 = pneg %p192
        $region66: #{tpu_custom_call.1} parent=55 // pred_check_branch
          %2527 = sbr.rel (%p2525) target = $region68
        $region67: #{tpu_custom_call.1} parent=55 // pred_region
          %s2528 = sand.u32 %s28, 1
          %s2529 = scalar_lea.sflag [#allocation8], %s2528
          %s2530 = sand.u32 %s177, 1
          %s2531 = scalar_lea.vmem [#allocation9], %s2530
          %2533 = dma.done %s2529, 16
        $region68: #{tpu_custom_call.1} parent=55 // pred_fallthru
          _
      $region56: #{tpu_custom_call.1} parent=5 // pred_fallthru
        _
    $region6: #{tpu_custom_call.1} parent=1 // loop_footer
      %s26 = sadd.s32 1, %s22
    $region7: #{tpu_custom_call.1} parent=1 // loop_footer_branch
      %21 = sbr.rel target = $region3
    $region8: #{tpu_custom_call.1} parent=1 // loop_exit
      _
    %2534 = vsyncpa [#allocation4], 1
    %s2535 = scalar_lea.sflag [#allocation4], 1
    %2536 = vsyncpa %s2535, 1
    %2537 = vsyncpa [#allocation5], 1
    %s2538 = scalar_lea.sflag [#allocation5], 1
    %2539 = vsyncpa %s2538, 1
    %2540 = vsyncpa [#allocation8], 1
    %s2541 = scalar_lea.sflag [#allocation8], 1
    %2542 = vsyncpa %s2541, 1

</llo_original>
